<compile_context>
chip_gen: v5e
topology: v5e:2x2
jax: 0.10.0
libtpu: 0.0.40
codegen_flags: <defaults>
</compile_context>

<pallas_src>
from functools import partial

import jax
import jax.numpy as jnp
from jax.experimental import pallas as pl
from jax.experimental.pallas import tpu as pltpu


def attentive_pooling_kernel(x_ref, w_ref, wc_ref, shift_ref, out_ref, logits_ref):
    # x_ref:      [1, K, d_in, T]   feature block, T points on the lane axis
    # w_ref:      [d_in, d_in]      score_fn Linear weight (bias dropped: no-op under softmax)
    # wc_ref:     [d_out, d_in]     1x1 conv weight with the BN scale folded in
    # shift_ref:  [d_out, 1]        folded conv-bias + BN shift
    # out_ref:    [1, d_out, T]     lane-dense output block
    # logits_ref: [K, d_in, T]      VMEM scratch holding the score logits
    num_k = x_ref.shape[1]
    w = w_ref[...]

    # Pass 1: per-neighbour score logits + running max over K (softmax stability).
    m = None
    for k in range(num_k):
        l_k = jnp.dot(w, x_ref[0, k], preferred_element_type=jnp.float32)
        logits_ref[k] = l_k
        m = l_k if m is None else jnp.maximum(m, l_k)

    # Pass 2: softmax over K fused with the weighted feature sum.
    denom = jnp.zeros_like(m)
    wsum = jnp.zeros_like(m)
    for k in range(num_k):
        e_k = jnp.exp(logits_ref[k] - m)
        denom = denom + e_k
        wsum = wsum + e_k * x_ref[0, k]

    # Normalize once at the end: EUP approx reciprocal + one Newton step.
    inv = pl.reciprocal(denom, approx=True)
    inv = inv * (2.0 - denom * inv)
    pooled = wsum * inv                                  # [d_in, T]

    # 1x1 conv (BN scale pre-folded) + shift + ReLU; lane-dense store.
    y = jnp.dot(wc_ref[...], pooled, preferred_element_type=jnp.float32)
    y = y + shift_ref[...]
    out_ref[0] = jnp.maximum(y, 0.0).astype(out_ref.dtype)


def _round_up(x, m):
    return (x + m - 1) // m * m


@partial(jax.jit, static_argnames=("eps", "tile_n"))
def attentive_pooling(feat, W, Wc, bc, gamma, beta, running_mean, running_var,
                      eps=1e-5, tile_n=512):
    """feat: [B, d_in, N, K] (PyTorch NCHW). Returns [B, d_out, N, 1]."""
    B, d_in, N, K = feat.shape
    d_out = Wc.shape[0]

    # Fold conv bias + inference BatchNorm into the conv weight and a per-channel shift.
    scale = gamma * jax.lax.rsqrt(running_var + eps)
    Wc_f = (Wc * scale[:, None]).astype(feat.dtype)
    shift = ((bc - running_mean) * scale + beta).astype(jnp.float32).reshape(d_out, 1)

    # Lane-friendly layout: [B, K, d_in, N] -- points (N) on the 128-lane axis.
    # (Done under the same jit as the pallas_call.)
    x = jnp.transpose(feat, (0, 3, 1, 2))

    # Tile the point axis; pad to a lane-aligned multiple of the tile (remainder-safe).
    tile_n = min(tile_n, _round_up(N, 128))
    assert tile_n % 128 == 0
    n_pad = _round_up(N, tile_n)
    if n_pad != N:
        x = jnp.pad(x, ((0, 0), (0, 0), (0, 0), (0, n_pad - N)))

    # Explicit VMEM budget (double-buffered in/out blocks + f32 logits scratch).
    itemsize = jnp.dtype(feat.dtype).itemsize
    vmem_est = (2 * K * d_in * tile_n * itemsize
                + 2 * d_out * tile_n * itemsize
                + K * d_in * tile_n * 4)
    vmem_limit = int(min(max(2 * vmem_est + (2 << 20), 16 << 20), 48 << 20))

    out = pl.pallas_call(
        attentive_pooling_kernel,
        out_shape=jax.ShapeDtypeStruct((B, d_out, n_pad), feat.dtype),
        grid=(B, n_pad // tile_n),
        in_specs=[
            pl.BlockSpec((1, K, d_in, tile_n), lambda b, n: (b, 0, 0, n)),  # features
            pl.BlockSpec((d_in, d_in), lambda b, n: (0, 0)),                # score W
            pl.BlockSpec((d_out, d_in), lambda b, n: (0, 0)),               # conv W (BN-folded)
            pl.BlockSpec((d_out, 1), lambda b, n: (0, 0)),                  # folded shift
        ],
        out_specs=pl.BlockSpec((1, d_out, tile_n), lambda b, n: (b, 0, n)),
        scratch_shapes=[pltpu.VMEM((K, d_in, tile_n), jnp.float32)],
        compiler_params=pltpu.CompilerParams(
            dimension_semantics=("parallel", "parallel"),
            vmem_limit_bytes=vmem_limit,
        ),
    )(x, W.astype(feat.dtype), Wc_f, shift)

    # [B, d_out, N_pad] is already channel-major (NCHW): just slice + add the K=1 axis.
    return out[:, :, :N, None]


def reference(feat, W, b, Wc, bc, gamma, beta, mean, var, eps=1e-5):
    """Pure-JAX replica of the PyTorch forward (inference-mode BN), score bias included."""
    hp = jax.lax.Precision.HIGHEST
    x = jnp.transpose(feat, (0, 2, 3, 1))                             # [B,N,K,d_in]
    logits = jnp.einsum('bnkd,cd->bnkc', x, W, precision=hp) + b
    scores = jax.nn.softmax(logits, axis=-2)                          # over K
    scores = jnp.transpose(scores, (0, 3, 1, 2))                      # [B,d_in,N,K]
    pooled = jnp.sum(scores * feat, axis=-1, keepdims=True)           # [B,d_in,N,1]
    conv = jnp.einsum('od,bdnk->bonk', Wc, pooled, precision=hp) + bc[None, :, None, None]
    bn = ((conv - mean[None, :, None, None])
          / jnp.sqrt(var[None, :, None, None] + eps)
          * gamma[None, :, None, None] + beta[None, :, None, None])
    return jnp.maximum(bn, 0.0)


if __name__ == "__main__":
    # RandLA-Net-style small shapes: B points-batches, d_in channels, N points, K neighbours.
    B, d_in, N, K, d_out = 2, 8, 200, 16, 16   # N not a multiple of 128 -> exercises padding

    key = jax.random.PRNGKey(0)
    k_feat, k_w, k_b, k_wc, k_bc, k_g, k_be = jax.random.split(key, 7)

    feat = jax.random.normal(k_feat, (B, d_in, N, K), dtype=jnp.float32)

    # score_fn Linear(d_in, d_in)  (bias only used by the reference: it is a softmax no-op)
    W = 0.1 * jax.random.normal(k_w, (d_in, d_in), dtype=jnp.float32)
    b = 0.1 * jax.random.normal(k_b, (d_in,), dtype=jnp.float32)
    # MLP: Conv2d(d_in, d_out, 1) + BatchNorm2d(d_out) + ReLU
    Wc = 0.1 * jax.random.normal(k_wc, (d_out, d_in), dtype=jnp.float32)
    bc = 0.1 * jax.random.normal(k_bc, (d_out,), dtype=jnp.float32)
    gamma = 1.0 + 0.1 * jax.random.normal(k_g, (d_out,), dtype=jnp.float32)
    beta = 0.1 * jax.random.normal(k_be, (d_out,), dtype=jnp.float32)
    running_mean = 0.05 * jnp.ones((d_out,), dtype=jnp.float32)
    running_var = 1.0 + 0.1 * jnp.arange(d_out, dtype=jnp.float32) / d_out

    out = attentive_pooling(feat, W, Wc, bc, gamma, beta, running_mean, running_var)
    out = jax.block_until_ready(out)

    ref = reference(feat, W, b, Wc, bc, gamma, beta, running_mean, running_var)
    assert out.shape == (B, d_out, N, 1), out.shape
    # Tolerance covers MXU default-precision f32 matmuls and the approx-reciprocal path.
    assert jnp.allclose(out, ref, atol=1e-3, rtol=1e-3), "mismatch vs reference"

    print("KERNEL_OK")
</pallas_src>

<mosaic_0001>
module attributes {stable_mosaic.version = 11 : i64} {
  func.func @attentive_pooling_kernel(%arg0: i32, %arg1: i32, %arg2: memref<1x16x8x256xf32, #tpu.memory_space<vmem>>, %arg3: memref<8x8xf32, #tpu.memory_space<vmem>>, %arg4: memref<16x8xf32, #tpu.memory_space<vmem>>, %arg5: memref<16x1xf32, #tpu.memory_space<vmem>>, %arg6: memref<1x16x256xf32, #tpu.memory_space<vmem>>, %arg7: memref<16x8x256xf32, #tpu.memory_space<vmem>>) attributes {dimension_semantics = [#tpu.dimension_semantics<parallel>, #tpu.dimension_semantics<parallel>], iteration_bounds = array<i64: 2, 1>, scalar_prefetch = 0 : i64, scratch_operands = 1 : i64, tpu.core_type = #tpu.core_type<tc>, window_params = [{transform_indices = @transform_0, window_bounds = array<i64: 1, 16, 8, 256>}, {pipeline_mode = #tpu.pipeline_mode<synchronous>, transform_indices = @transform_1, window_bounds = array<i64: 8, 8>}, {pipeline_mode = #tpu.pipeline_mode<synchronous>, transform_indices = @transform_2, window_bounds = array<i64: 16, 8>}, {pipeline_mode = #tpu.pipeline_mode<synchronous>, transform_indices = @transform_3, window_bounds = array<i64: 16, 1>}, {transform_indices = @transform_4, window_bounds = array<i64: 1, 16, 256>}]} {
    %c0 = arith.constant 0 : index
    %c0_0 = arith.constant 0 : index
    %0 = vector.load %arg3[%c0, %c0_0] : memref<8x8xf32, #tpu.memory_space<vmem>>, vector<8x8xf32>
    %c0_1 = arith.constant 0 : index
    %c0_2 = arith.constant 0 : index
    %c0_3 = arith.constant 0 : index
    %c0_4 = arith.constant 0 : index
    %1 = vector.load %arg2[%c0_1, %c0_2, %c0_3, %c0_4] : memref<1x16x8x256xf32, #tpu.memory_space<vmem>>, vector<1x1x8x256xf32>
    %2 = vector.shape_cast %1 : vector<1x1x8x256xf32> to vector<8x256xf32>
    %cst = arith.constant dense<0.000000e+00> : vector<8x256xf32>
    %3 = tpu.matmul %0, %2, %cst {dimension_numbers = #tpu.dot_dimension_numbers<[1], [0], [0], [1], [0, 0, 1, 1], [], []>} : vector<8x8xf32>, vector<8x256xf32>, vector<8x256xf32> -> vector<8x256xf32>
    %c0_5 = arith.constant 0 : index
    %c0_6 = arith.constant 0 : index
    %c0_7 = arith.constant 0 : index
    %4 = vector.load %arg7[%c0_5, %c0_6, %c0_7] : memref<16x8x256xf32, #tpu.memory_space<vmem>>, vector<1x8x256xf32>
    %5 = vector.shape_cast %4 : vector<1x8x256xf32> to vector<8x256xf32>
    %6 = vector.shape_cast %3 : vector<8x256xf32> to vector<1x8x256xf32>
    tpu.vector_store %arg7[%c0_5, %c0_6, %c0_7], %6 {strides = array<i32>} : memref<16x8x256xf32, #tpu.memory_space<vmem>>, vector<1x8x256xf32>,
    %c0_8 = arith.constant 0 : index
    %c1 = arith.constant 1 : index
    %c0_9 = arith.constant 0 : index
    %c0_10 = arith.constant 0 : index
    %7 = vector.load %arg2[%c0_8, %c1, %c0_9, %c0_10] : memref<1x16x8x256xf32, #tpu.memory_space<vmem>>, vector<1x1x8x256xf32>
    %8 = vector.shape_cast %7 : vector<1x1x8x256xf32> to vector<8x256xf32>
    %cst_11 = arith.constant dense<0.000000e+00> : vector<8x256xf32>
    %9 = tpu.matmul %0, %8, %cst_11 {dimension_numbers = #tpu.dot_dimension_numbers<[1], [0], [0], [1], [0, 0, 1, 1], [], []>} : vector<8x8xf32>, vector<8x256xf32>, vector<8x256xf32> -> vector<8x256xf32>
    %c1_12 = arith.constant 1 : index
    %c0_13 = arith.constant 0 : index
    %c0_14 = arith.constant 0 : index
    %10 = vector.load %arg7[%c1_12, %c0_13, %c0_14] : memref<16x8x256xf32, #tpu.memory_space<vmem>>, vector<1x8x256xf32>
    %11 = vector.shape_cast %10 : vector<1x8x256xf32> to vector<8x256xf32>
    %12 = vector.shape_cast %9 : vector<8x256xf32> to vector<1x8x256xf32>
    tpu.vector_store %arg7[%c1_12, %c0_13, %c0_14], %12 {strides = array<i32>} : memref<16x8x256xf32, #tpu.memory_space<vmem>>, vector<1x8x256xf32>,
    %13 = arith.maximumf %3, %9 : vector<8x256xf32>
    %c0_15 = arith.constant 0 : index
    %c2 = arith.constant 2 : index
    %c0_16 = arith.constant 0 : index
    %c0_17 = arith.constant 0 : index
    %14 = vector.load %arg2[%c0_15, %c2, %c0_16, %c0_17] : memref<1x16x8x256xf32, #tpu.memory_space<vmem>>, vector<1x1x8x256xf32>
    %15 = vector.shape_cast %14 : vector<1x1x8x256xf32> to vector<8x256xf32>
    %cst_18 = arith.constant dense<0.000000e+00> : vector<8x256xf32>
    %16 = tpu.matmul %0, %15, %cst_18 {dimension_numbers = #tpu.dot_dimension_numbers<[1], [0], [0], [1], [0, 0, 1, 1], [], []>} : vector<8x8xf32>, vector<8x256xf32>, vector<8x256xf32> -> vector<8x256xf32>
    %c2_19 = arith.constant 2 : index
    %c0_20 = arith.constant 0 : index
    %c0_21 = arith.constant 0 : index
    %17 = vector.load %arg7[%c2_19, %c0_20, %c0_21] : memref<16x8x256xf32, #tpu.memory_space<vmem>>, vector<1x8x256xf32>
    %18 = vector.shape_cast %17 : vector<1x8x256xf32> to vector<8x256xf32>
    %19 = vector.shape_cast %16 : vector<8x256xf32> to vector<1x8x256xf32>
    tpu.vector_store %arg7[%c2_19, %c0_20, %c0_21], %19 {strides = array<i32>} : memref<16x8x256xf32, #tpu.memory_space<vmem>>, vector<1x8x256xf32>,
    %20 = arith.maximumf %13, %16 : vector<8x256xf32>
    %c0_22 = arith.constant 0 : index
    %c3 = arith.constant 3 : index
    %c0_23 = arith.constant 0 : index
    %c0_24 = arith.constant 0 : index
    %21 = vector.load %arg2[%c0_22, %c3, %c0_23, %c0_24] : memref<1x16x8x256xf32, #tpu.memory_space<vmem>>, vector<1x1x8x256xf32>
    %22 = vector.shape_cast %21 : vector<1x1x8x256xf32> to vector<8x256xf32>
    %cst_25 = arith.constant dense<0.000000e+00> : vector<8x256xf32>
    %23 = tpu.matmul %0, %22, %cst_25 {dimension_numbers = #tpu.dot_dimension_numbers<[1], [0], [0], [1], [0, 0, 1, 1], [], []>} : vector<8x8xf32>, vector<8x256xf32>, vector<8x256xf32> -> vector<8x256xf32>
    %c3_26 = arith.constant 3 : index
    %c0_27 = arith.constant 0 : index
    %c0_28 = arith.constant 0 : index
    %24 = vector.load %arg7[%c3_26, %c0_27, %c0_28] : memref<16x8x256xf32, #tpu.memory_space<vmem>>, vector<1x8x256xf32>
    %25 = vector.shape_cast %24 : vector<1x8x256xf32> to vector<8x256xf32>
    %26 = vector.shape_cast %23 : vector<8x256xf32> to vector<1x8x256xf32>
    tpu.vector_store %arg7[%c3_26, %c0_27, %c0_28], %26 {strides = array<i32>} : memref<16x8x256xf32, #tpu.memory_space<vmem>>, vector<1x8x256xf32>,
    %27 = arith.maximumf %20, %23 : vector<8x256xf32>
    %c0_29 = arith.constant 0 : index
    %c4 = arith.constant 4 : index
    %c0_30 = arith.constant 0 : index
    %c0_31 = arith.constant 0 : index
    %28 = vector.load %arg2[%c0_29, %c4, %c0_30, %c0_31] : memref<1x16x8x256xf32, #tpu.memory_space<vmem>>, vector<1x1x8x256xf32>
    %29 = vector.shape_cast %28 : vector<1x1x8x256xf32> to vector<8x256xf32>
    %cst_32 = arith.constant dense<0.000000e+00> : vector<8x256xf32>
    %30 = tpu.matmul %0, %29, %cst_32 {dimension_numbers = #tpu.dot_dimension_numbers<[1], [0], [0], [1], [0, 0, 1, 1], [], []>} : vector<8x8xf32>, vector<8x256xf32>, vector<8x256xf32> -> vector<8x256xf32>
    %c4_33 = arith.constant 4 : index
    %c0_34 = arith.constant 0 : index
    %c0_35 = arith.constant 0 : index
    %31 = vector.load %arg7[%c4_33, %c0_34, %c0_35] : memref<16x8x256xf32, #tpu.memory_space<vmem>>, vector<1x8x256xf32>
    %32 = vector.shape_cast %31 : vector<1x8x256xf32> to vector<8x256xf32>
    %33 = vector.shape_cast %30 : vector<8x256xf32> to vector<1x8x256xf32>
    tpu.vector_store %arg7[%c4_33, %c0_34, %c0_35], %33 {strides = array<i32>} : memref<16x8x256xf32, #tpu.memory_space<vmem>>, vector<1x8x256xf32>,
    %34 = arith.maximumf %27, %30 : vector<8x256xf32>
    %c0_36 = arith.constant 0 : index
    %c5 = arith.constant 5 : index
    %c0_37 = arith.constant 0 : index
    %c0_38 = arith.constant 0 : index
    %35 = vector.load %arg2[%c0_36, %c5, %c0_37, %c0_38] : memref<1x16x8x256xf32, #tpu.memory_space<vmem>>, vector<1x1x8x256xf32>
    %36 = vector.shape_cast %35 : vector<1x1x8x256xf32> to vector<8x256xf32>
    %cst_39 = arith.constant dense<0.000000e+00> : vector<8x256xf32>
    %37 = tpu.matmul %0, %36, %cst_39 {dimension_numbers = #tpu.dot_dimension_numbers<[1], [0], [0], [1], [0, 0, 1, 1], [], []>} : vector<8x8xf32>, vector<8x256xf32>, vector<8x256xf32> -> vector<8x256xf32>
    %c5_40 = arith.constant 5 : index
    %c0_41 = arith.constant 0 : index
    %c0_42 = arith.constant 0 : index
    %38 = vector.load %arg7[%c5_40, %c0_41, %c0_42] : memref<16x8x256xf32, #tpu.memory_space<vmem>>, vector<1x8x256xf32>
    %39 = vector.shape_cast %38 : vector<1x8x256xf32> to vector<8x256xf32>
    %40 = vector.shape_cast %37 : vector<8x256xf32> to vector<1x8x256xf32>
    tpu.vector_store %arg7[%c5_40, %c0_41, %c0_42], %40 {strides = array<i32>} : memref<16x8x256xf32, #tpu.memory_space<vmem>>, vector<1x8x256xf32>,
    %41 = arith.maximumf %34, %37 : vector<8x256xf32>
    %c0_43 = arith.constant 0 : index
    %c6 = arith.constant 6 : index
    %c0_44 = arith.constant 0 : index
    %c0_45 = arith.constant 0 : index
    %42 = vector.load %arg2[%c0_43, %c6, %c0_44, %c0_45] : memref<1x16x8x256xf32, #tpu.memory_space<vmem>>, vector<1x1x8x256xf32>
    %43 = vector.shape_cast %42 : vector<1x1x8x256xf32> to vector<8x256xf32>
    %cst_46 = arith.constant dense<0.000000e+00> : vector<8x256xf32>
    %44 = tpu.matmul %0, %43, %cst_46 {dimension_numbers = #tpu.dot_dimension_numbers<[1], [0], [0], [1], [0, 0, 1, 1], [], []>} : vector<8x8xf32>, vector<8x256xf32>, vector<8x256xf32> -> vector<8x256xf32>
    %c6_47 = arith.constant 6 : index
    %c0_48 = arith.constant 0 : index
    %c0_49 = arith.constant 0 : index
    %45 = vector.load %arg7[%c6_47, %c0_48, %c0_49] : memref<16x8x256xf32, #tpu.memory_space<vmem>>, vector<1x8x256xf32>
    %46 = vector.shape_cast %45 : vector<1x8x256xf32> to vector<8x256xf32>
    %47 = vector.shape_cast %44 : vector<8x256xf32> to vector<1x8x256xf32>
    tpu.vector_store %arg7[%c6_47, %c0_48, %c0_49], %47 {strides = array<i32>} : memref<16x8x256xf32, #tpu.memory_space<vmem>>, vector<1x8x256xf32>,
    %48 = arith.maximumf %41, %44 : vector<8x256xf32>
    %c0_50 = arith.constant 0 : index
    %c7 = arith.constant 7 : index
    %c0_51 = arith.constant 0 : index
    %c0_52 = arith.constant 0 : index
    %49 = vector.load %arg2[%c0_50, %c7, %c0_51, %c0_52] : memref<1x16x8x256xf32, #tpu.memory_space<vmem>>, vector<1x1x8x256xf32>
    %50 = vector.shape_cast %49 : vector<1x1x8x256xf32> to vector<8x256xf32>
    %cst_53 = arith.constant dense<0.000000e+00> : vector<8x256xf32>
    %51 = tpu.matmul %0, %50, %cst_53 {dimension_numbers = #tpu.dot_dimension_numbers<[1], [0], [0], [1], [0, 0, 1, 1], [], []>} : vector<8x8xf32>, vector<8x256xf32>, vector<8x256xf32> -> vector<8x256xf32>
    %c7_54 = arith.constant 7 : index
    %c0_55 = arith.constant 0 : index
    %c0_56 = arith.constant 0 : index
    %52 = vector.load %arg7[%c7_54, %c0_55, %c0_56] : memref<16x8x256xf32, #tpu.memory_space<vmem>>, vector<1x8x256xf32>
    %53 = vector.shape_cast %52 : vector<1x8x256xf32> to vector<8x256xf32>
    %54 = vector.shape_cast %51 : vector<8x256xf32> to vector<1x8x256xf32>
    tpu.vector_store %arg7[%c7_54, %c0_55, %c0_56], %54 {strides = array<i32>} : memref<16x8x256xf32, #tpu.memory_space<vmem>>, vector<1x8x256xf32>,
    %55 = arith.maximumf %48, %51 : vector<8x256xf32>
    %c0_57 = arith.constant 0 : index
    %c8 = arith.constant 8 : index
    %c0_58 = arith.constant 0 : index
    %c0_59 = arith.constant 0 : index
    %56 = vector.load %arg2[%c0_57, %c8, %c0_58, %c0_59] : memref<1x16x8x256xf32, #tpu.memory_space<vmem>>, vector<1x1x8x256xf32>
    %57 = vector.shape_cast %56 : vector<1x1x8x256xf32> to vector<8x256xf32>
    %cst_60 = arith.constant dense<0.000000e+00> : vector<8x256xf32>
    %58 = tpu.matmul %0, %57, %cst_60 {dimension_numbers = #tpu.dot_dimension_numbers<[1], [0], [0], [1], [0, 0, 1, 1], [], []>} : vector<8x8xf32>, vector<8x256xf32>, vector<8x256xf32> -> vector<8x256xf32>
    %c8_61 = arith.constant 8 : index
    %c0_62 = arith.constant 0 : index
    %c0_63 = arith.constant 0 : index
    %59 = vector.load %arg7[%c8_61, %c0_62, %c0_63] : memref<16x8x256xf32, #tpu.memory_space<vmem>>, vector<1x8x256xf32>
    %60 = vector.shape_cast %59 : vector<1x8x256xf32> to vector<8x256xf32>
    %61 = vector.shape_cast %58 : vector<8x256xf32> to vector<1x8x256xf32>
    tpu.vector_store %arg7[%c8_61, %c0_62, %c0_63], %61 {strides = array<i32>} : memref<16x8x256xf32, #tpu.memory_space<vmem>>, vector<1x8x256xf32>,
    %62 = arith.maximumf %55, %58 : vector<8x256xf32>
    %c0_64 = arith.constant 0 : index
    %c9 = arith.constant 9 : index
    %c0_65 = arith.constant 0 : index
    %c0_66 = arith.constant 0 : index
    %63 = vector.load %arg2[%c0_64, %c9, %c0_65, %c0_66] : memref<1x16x8x256xf32, #tpu.memory_space<vmem>>, vector<1x1x8x256xf32>
    %64 = vector.shape_cast %63 : vector<1x1x8x256xf32> to vector<8x256xf32>
    %cst_67 = arith.constant dense<0.000000e+00> : vector<8x256xf32>
    %65 = tpu.matmul %0, %64, %cst_67 {dimension_numbers = #tpu.dot_dimension_numbers<[1], [0], [0], [1], [0, 0, 1, 1], [], []>} : vector<8x8xf32>, vector<8x256xf32>, vector<8x256xf32> -> vector<8x256xf32>
    %c9_68 = arith.constant 9 : index
    %c0_69 = arith.constant 0 : index
    %c0_70 = arith.constant 0 : index
    %66 = vector.load %arg7[%c9_68, %c0_69, %c0_70] : memref<16x8x256xf32, #tpu.memory_space<vmem>>, vector<1x8x256xf32>
    %67 = vector.shape_cast %66 : vector<1x8x256xf32> to vector<8x256xf32>
    %68 = vector.shape_cast %65 : vector<8x256xf32> to vector<1x8x256xf32>
    tpu.vector_store %arg7[%c9_68, %c0_69, %c0_70], %68 {strides = array<i32>} : memref<16x8x256xf32, #tpu.memory_space<vmem>>, vector<1x8x256xf32>,
    %69 = arith.maximumf %62, %65 : vector<8x256xf32>
    %c0_71 = arith.constant 0 : index
    %c10 = arith.constant 10 : index
    %c0_72 = arith.constant 0 : index
    %c0_73 = arith.constant 0 : index
    %70 = vector.load %arg2[%c0_71, %c10, %c0_72, %c0_73] : memref<1x16x8x256xf32, #tpu.memory_space<vmem>>, vector<1x1x8x256xf32>
    %71 = vector.shape_cast %70 : vector<1x1x8x256xf32> to vector<8x256xf32>
    %cst_74 = arith.constant dense<0.000000e+00> : vector<8x256xf32>
    %72 = tpu.matmul %0, %71, %cst_74 {dimension_numbers = #tpu.dot_dimension_numbers<[1], [0], [0], [1], [0, 0, 1, 1], [], []>} : vector<8x8xf32>, vector<8x256xf32>, vector<8x256xf32> -> vector<8x256xf32>
    %c10_75 = arith.constant 10 : index
    %c0_76 = arith.constant 0 : index
    %c0_77 = arith.constant 0 : index
    %73 = vector.load %arg7[%c10_75, %c0_76, %c0_77] : memref<16x8x256xf32, #tpu.memory_space<vmem>>, vector<1x8x256xf32>
    %74 = vector.shape_cast %73 : vector<1x8x256xf32> to vector<8x256xf32>
    %75 = vector.shape_cast %72 : vector<8x256xf32> to vector<1x8x256xf32>
    tpu.vector_store %arg7[%c10_75, %c0_76, %c0_77], %75 {strides = array<i32>} : memref<16x8x256xf32, #tpu.memory_space<vmem>>, vector<1x8x256xf32>,
    %76 = arith.maximumf %69, %72 : vector<8x256xf32>
    %c0_78 = arith.constant 0 : index
    %c11 = arith.constant 11 : index
    %c0_79 = arith.constant 0 : index
    %c0_80 = arith.constant 0 : index
    %77 = vector.load %arg2[%c0_78, %c11, %c0_79, %c0_80] : memref<1x16x8x256xf32, #tpu.memory_space<vmem>>, vector<1x1x8x256xf32>
    %78 = vector.shape_cast %77 : vector<1x1x8x256xf32> to vector<8x256xf32>
    %cst_81 = arith.constant dense<0.000000e+00> : vector<8x256xf32>
    %79 = tpu.matmul %0, %78, %cst_81 {dimension_numbers = #tpu.dot_dimension_numbers<[1], [0], [0], [1], [0, 0, 1, 1], [], []>} : vector<8x8xf32>, vector<8x256xf32>, vector<8x256xf32> -> vector<8x256xf32>
    %c11_82 = arith.constant 11 : index
    %c0_83 = arith.constant 0 : index
    %c0_84 = arith.constant 0 : index
    %80 = vector.load %arg7[%c11_82, %c0_83, %c0_84] : memref<16x8x256xf32, #tpu.memory_space<vmem>>, vector<1x8x256xf32>
    %81 = vector.shape_cast %80 : vector<1x8x256xf32> to vector<8x256xf32>
    %82 = vector.shape_cast %79 : vector<8x256xf32> to vector<1x8x256xf32>
    tpu.vector_store %arg7[%c11_82, %c0_83, %c0_84], %82 {strides = array<i32>} : memref<16x8x256xf32, #tpu.memory_space<vmem>>, vector<1x8x256xf32>,
    %83 = arith.maximumf %76, %79 : vector<8x256xf32>
    %c0_85 = arith.constant 0 : index
    %c12 = arith.constant 12 : index
    %c0_86 = arith.constant 0 : index
    %c0_87 = arith.constant 0 : index
    %84 = vector.load %arg2[%c0_85, %c12, %c0_86, %c0_87] : memref<1x16x8x256xf32, #tpu.memory_space<vmem>>, vector<1x1x8x256xf32>
    %85 = vector.shape_cast %84 : vector<1x1x8x256xf32> to vector<8x256xf32>
    %cst_88 = arith.constant dense<0.000000e+00> : vector<8x256xf32>
    %86 = tpu.matmul %0, %85, %cst_88 {dimension_numbers = #tpu.dot_dimension_numbers<[1], [0], [0], [1], [0, 0, 1, 1], [], []>} : vector<8x8xf32>, vector<8x256xf32>, vector<8x256xf32> -> vector<8x256xf32>
    %c12_89 = arith.constant 12 : index
    %c0_90 = arith.constant 0 : index
    %c0_91 = arith.constant 0 : index
    %87 = vector.load %arg7[%c12_89, %c0_90, %c0_91] : memref<16x8x256xf32, #tpu.memory_space<vmem>>, vector<1x8x256xf32>
    %88 = vector.shape_cast %87 : vector<1x8x256xf32> to vector<8x256xf32>
    %89 = vector.shape_cast %86 : vector<8x256xf32> to vector<1x8x256xf32>
    tpu.vector_store %arg7[%c12_89, %c0_90, %c0_91], %89 {strides = array<i32>} : memref<16x8x256xf32, #tpu.memory_space<vmem>>, vector<1x8x256xf32>,
    %90 = arith.maximumf %83, %86 : vector<8x256xf32>
    %c0_92 = arith.constant 0 : index
    %c13 = arith.constant 13 : index
    %c0_93 = arith.constant 0 : index
    %c0_94 = arith.constant 0 : index
    %91 = vector.load %arg2[%c0_92, %c13, %c0_93, %c0_94] : memref<1x16x8x256xf32, #tpu.memory_space<vmem>>, vector<1x1x8x256xf32>
    %92 = vector.shape_cast %91 : vector<1x1x8x256xf32> to vector<8x256xf32>
    %cst_95 = arith.constant dense<0.000000e+00> : vector<8x256xf32>
    %93 = tpu.matmul %0, %92, %cst_95 {dimension_numbers = #tpu.dot_dimension_numbers<[1], [0], [0], [1], [0, 0, 1, 1], [], []>} : vector<8x8xf32>, vector<8x256xf32>, vector<8x256xf32> -> vector<8x256xf32>
    %c13_96 = arith.constant 13 : index
    %c0_97 = arith.constant 0 : index
    %c0_98 = arith.constant 0 : index
    %94 = vector.load %arg7[%c13_96, %c0_97, %c0_98] : memref<16x8x256xf32, #tpu.memory_space<vmem>>, vector<1x8x256xf32>
    %95 = vector.shape_cast %94 : vector<1x8x256xf32> to vector<8x256xf32>
    %96 = vector.shape_cast %93 : vector<8x256xf32> to vector<1x8x256xf32>
    tpu.vector_store %arg7[%c13_96, %c0_97, %c0_98], %96 {strides = array<i32>} : memref<16x8x256xf32, #tpu.memory_space<vmem>>, vector<1x8x256xf32>,
    %97 = arith.maximumf %90, %93 : vector<8x256xf32>
    %c0_99 = arith.constant 0 : index
    %c14 = arith.constant 14 : index
    %c0_100 = arith.constant 0 : index
    %c0_101 = arith.constant 0 : index
    %98 = vector.load %arg2[%c0_99, %c14, %c0_100, %c0_101] : memref<1x16x8x256xf32, #tpu.memory_space<vmem>>, vector<1x1x8x256xf32>
    %99 = vector.shape_cast %98 : vector<1x1x8x256xf32> to vector<8x256xf32>
    %cst_102 = arith.constant dense<0.000000e+00> : vector<8x256xf32>
    %100 = tpu.matmul %0, %99, %cst_102 {dimension_numbers = #tpu.dot_dimension_numbers<[1], [0], [0], [1], [0, 0, 1, 1], [], []>} : vector<8x8xf32>, vector<8x256xf32>, vector<8x256xf32> -> vector<8x256xf32>
    %c14_103 = arith.constant 14 : index
    %c0_104 = arith.constant 0 : index
    %c0_105 = arith.constant 0 : index
    %101 = vector.load %arg7[%c14_103, %c0_104, %c0_105] : memref<16x8x256xf32, #tpu.memory_space<vmem>>, vector<1x8x256xf32>
    %102 = vector.shape_cast %101 : vector<1x8x256xf32> to vector<8x256xf32>
    %103 = vector.shape_cast %100 : vector<8x256xf32> to vector<1x8x256xf32>
    tpu.vector_store %arg7[%c14_103, %c0_104, %c0_105], %103 {strides = array<i32>} : memref<16x8x256xf32, #tpu.memory_space<vmem>>, vector<1x8x256xf32>,
    %104 = arith.maximumf %97, %100 : vector<8x256xf32>
    %c0_106 = arith.constant 0 : index
    %c15 = arith.constant 15 : index
    %c0_107 = arith.constant 0 : index
    %c0_108 = arith.constant 0 : index
    %105 = vector.load %arg2[%c0_106, %c15, %c0_107, %c0_108] : memref<1x16x8x256xf32, #tpu.memory_space<vmem>>, vector<1x1x8x256xf32>
    %106 = vector.shape_cast %105 : vector<1x1x8x256xf32> to vector<8x256xf32>
    %cst_109 = arith.constant dense<0.000000e+00> : vector<8x256xf32>
    %107 = tpu.matmul %0, %106, %cst_109 {dimension_numbers = #tpu.dot_dimension_numbers<[1], [0], [0], [1], [0, 0, 1, 1], [], []>} : vector<8x8xf32>, vector<8x256xf32>, vector<8x256xf32> -> vector<8x256xf32>
    %c15_110 = arith.constant 15 : index
    %c0_111 = arith.constant 0 : index
    %c0_112 = arith.constant 0 : index
    %108 = vector.load %arg7[%c15_110, %c0_111, %c0_112] : memref<16x8x256xf32, #tpu.memory_space<vmem>>, vector<1x8x256xf32>
    %109 = vector.shape_cast %108 : vector<1x8x256xf32> to vector<8x256xf32>
    %110 = vector.shape_cast %107 : vector<8x256xf32> to vector<1x8x256xf32>
    tpu.vector_store %arg7[%c15_110, %c0_111, %c0_112], %110 {strides = array<i32>} : memref<16x8x256xf32, #tpu.memory_space<vmem>>, vector<1x8x256xf32>,
    %111 = arith.maximumf %104, %107 : vector<8x256xf32>
    %cst_113 = arith.constant 0.000000e+00 : f32
    %112 = vector.broadcast %cst_113 : f32 to vector<8x256xf32>
    %cst_114 = arith.constant 0.000000e+00 : f32
    %113 = vector.broadcast %cst_114 : f32 to vector<8x256xf32>
    %c0_115 = arith.constant 0 : index
    %c0_116 = arith.constant 0 : index
    %c0_117 = arith.constant 0 : index
    %114 = vector.load %arg7[%c0_115, %c0_116, %c0_117] : memref<16x8x256xf32, #tpu.memory_space<vmem>>, vector<1x8x256xf32>
    %115 = vector.shape_cast %114 : vector<1x8x256xf32> to vector<8x256xf32>
    %116 = arith.subf %115, %111 : vector<8x256xf32>
    %117 = math.exp %116 : vector<8x256xf32>
    %118 = arith.addf %112, %117 : vector<8x256xf32>
    %c0_118 = arith.constant 0 : index
    %c0_119 = arith.constant 0 : index
    %c0_120 = arith.constant 0 : index
    %c0_121 = arith.constant 0 : index
    %119 = vector.load %arg2[%c0_118, %c0_119, %c0_120, %c0_121] : memref<1x16x8x256xf32, #tpu.memory_space<vmem>>, vector<1x1x8x256xf32>
    %120 = vector.shape_cast %119 : vector<1x1x8x256xf32> to vector<8x256xf32>
    %121 = arith.mulf %117, %120 : vector<8x256xf32>
    %122 = arith.addf %113, %121 : vector<8x256xf32>
    %c1_122 = arith.constant 1 : index
    %c0_123 = arith.constant 0 : index
    %c0_124 = arith.constant 0 : index
    %123 = vector.load %arg7[%c1_122, %c0_123, %c0_124] : memref<16x8x256xf32, #tpu.memory_space<vmem>>, vector<1x8x256xf32>
    %124 = vector.shape_cast %123 : vector<1x8x256xf32> to vector<8x256xf32>
    %125 = arith.subf %124, %111 : vector<8x256xf32>
    %126 = math.exp %125 : vector<8x256xf32>
    %127 = arith.addf %118, %126 : vector<8x256xf32>
    %c0_125 = arith.constant 0 : index
    %c1_126 = arith.constant 1 : index
    %c0_127 = arith.constant 0 : index
    %c0_128 = arith.constant 0 : index
    %128 = vector.load %arg2[%c0_125, %c1_126, %c0_127, %c0_128] : memref<1x16x8x256xf32, #tpu.memory_space<vmem>>, vector<1x1x8x256xf32>
    %129 = vector.shape_cast %128 : vector<1x1x8x256xf32> to vector<8x256xf32>
    %130 = arith.mulf %126, %129 : vector<8x256xf32>
    %131 = arith.addf %122, %130 : vector<8x256xf32>
    %c2_129 = arith.constant 2 : index
    %c0_130 = arith.constant 0 : index
    %c0_131 = arith.constant 0 : index
    %132 = vector.load %arg7[%c2_129, %c0_130, %c0_131] : memref<16x8x256xf32, #tpu.memory_space<vmem>>, vector<1x8x256xf32>
    %133 = vector.shape_cast %132 : vector<1x8x256xf32> to vector<8x256xf32>
    %134 = arith.subf %133, %111 : vector<8x256xf32>
    %135 = math.exp %134 : vector<8x256xf32>
    %136 = arith.addf %127, %135 : vector<8x256xf32>
    %c0_132 = arith.constant 0 : index
    %c2_133 = arith.constant 2 : index
    %c0_134 = arith.constant 0 : index
    %c0_135 = arith.constant 0 : index
    %137 = vector.load %arg2[%c0_132, %c2_133, %c0_134, %c0_135] : memref<1x16x8x256xf32, #tpu.memory_space<vmem>>, vector<1x1x8x256xf32>
    %138 = vector.shape_cast %137 : vector<1x1x8x256xf32> to vector<8x256xf32>
    %139 = arith.mulf %135, %138 : vector<8x256xf32>
    %140 = arith.addf %131, %139 : vector<8x256xf32>
    %c3_136 = arith.constant 3 : index
    %c0_137 = arith.constant 0 : index
    %c0_138 = arith.constant 0 : index
    %141 = vector.load %arg7[%c3_136, %c0_137, %c0_138] : memref<16x8x256xf32, #tpu.memory_space<vmem>>, vector<1x8x256xf32>
    %142 = vector.shape_cast %141 : vector<1x8x256xf32> to vector<8x256xf32>
    %143 = arith.subf %142, %111 : vector<8x256xf32>
    %144 = math.exp %143 : vector<8x256xf32>
    %145 = arith.addf %136, %144 : vector<8x256xf32>
    %c0_139 = arith.constant 0 : index
    %c3_140 = arith.constant 3 : index
    %c0_141 = arith.constant 0 : index
    %c0_142 = arith.constant 0 : index
    %146 = vector.load %arg2[%c0_139, %c3_140, %c0_141, %c0_142] : memref<1x16x8x256xf32, #tpu.memory_space<vmem>>, vector<1x1x8x256xf32>
    %147 = vector.shape_cast %146 : vector<1x1x8x256xf32> to vector<8x256xf32>
    %148 = arith.mulf %144, %147 : vector<8x256xf32>
    %149 = arith.addf %140, %148 : vector<8x256xf32>
    %c4_143 = arith.constant 4 : index
    %c0_144 = arith.constant 0 : index
    %c0_145 = arith.constant 0 : index
    %150 = vector.load %arg7[%c4_143, %c0_144, %c0_145] : memref<16x8x256xf32, #tpu.memory_space<vmem>>, vector<1x8x256xf32>
    %151 = vector.shape_cast %150 : vector<1x8x256xf32> to vector<8x256xf32>
    %152 = arith.subf %151, %111 : vector<8x256xf32>
    %153 = math.exp %152 : vector<8x256xf32>
    %154 = arith.addf %145, %153 : vector<8x256xf32>
    %c0_146 = arith.constant 0 : index
    %c4_147 = arith.constant 4 : index
    %c0_148 = arith.constant 0 : index
    %c0_149 = arith.constant 0 : index
    %155 = vector.load %arg2[%c0_146, %c4_147, %c0_148, %c0_149] : memref<1x16x8x256xf32, #tpu.memory_space<vmem>>, vector<1x1x8x256xf32>
    %156 = vector.shape_cast %155 : vector<1x1x8x256xf32> to vector<8x256xf32>
    %157 = arith.mulf %153, %156 : vector<8x256xf32>
    %158 = arith.addf %149, %157 : vector<8x256xf32>
    %c5_150 = arith.constant 5 : index
    %c0_151 = arith.constant 0 : index
    %c0_152 = arith.constant 0 : index
    %159 = vector.load %arg7[%c5_150, %c0_151, %c0_152] : memref<16x8x256xf32, #tpu.memory_space<vmem>>, vector<1x8x256xf32>
    %160 = vector.shape_cast %159 : vector<1x8x256xf32> to vector<8x256xf32>
    %161 = arith.subf %160, %111 : vector<8x256xf32>
    %162 = math.exp %161 : vector<8x256xf32>
    %163 = arith.addf %154, %162 : vector<8x256xf32>
    %c0_153 = arith.constant 0 : index
    %c5_154 = arith.constant 5 : index
    %c0_155 = arith.constant 0 : index
    %c0_156 = arith.constant 0 : index
    %164 = vector.load %arg2[%c0_153, %c5_154, %c0_155, %c0_156] : memref<1x16x8x256xf32, #tpu.memory_space<vmem>>, vector<1x1x8x256xf32>
    %165 = vector.shape_cast %164 : vector<1x1x8x256xf32> to vector<8x256xf32>
    %166 = arith.mulf %162, %165 : vector<8x256xf32>
    %167 = arith.addf %158, %166 : vector<8x256xf32>
    %c6_157 = arith.constant 6 : index
    %c0_158 = arith.constant 0 : index
    %c0_159 = arith.constant 0 : index
    %168 = vector.load %arg7[%c6_157, %c0_158, %c0_159] : memref<16x8x256xf32, #tpu.memory_space<vmem>>, vector<1x8x256xf32>
    %169 = vector.shape_cast %168 : vector<1x8x256xf32> to vector<8x256xf32>
    %170 = arith.subf %169, %111 : vector<8x256xf32>
    %171 = math.exp %170 : vector<8x256xf32>
    %172 = arith.addf %163, %171 : vector<8x256xf32>
    %c0_160 = arith.constant 0 : index
    %c6_161 = arith.constant 6 : index
    %c0_162 = arith.constant 0 : index
    %c0_163 = arith.constant 0 : index
    %173 = vector.load %arg2[%c0_160, %c6_161, %c0_162, %c0_163] : memref<1x16x8x256xf32, #tpu.memory_space<vmem>>, vector<1x1x8x256xf32>
    %174 = vector.shape_cast %173 : vector<1x1x8x256xf32> to vector<8x256xf32>
    %175 = arith.mulf %171, %174 : vector<8x256xf32>
    %176 = arith.addf %167, %175 : vector<8x256xf32>
    %c7_164 = arith.constant 7 : index
    %c0_165 = arith.constant 0 : index
    %c0_166 = arith.constant 0 : index
    %177 = vector.load %arg7[%c7_164, %c0_165, %c0_166] : memref<16x8x256xf32, #tpu.memory_space<vmem>>, vector<1x8x256xf32>
    %178 = vector.shape_cast %177 : vector<1x8x256xf32> to vector<8x256xf32>
    %179 = arith.subf %178, %111 : vector<8x256xf32>
    %180 = math.exp %179 : vector<8x256xf32>
    %181 = arith.addf %172, %180 : vector<8x256xf32>
    %c0_167 = arith.constant 0 : index
    %c7_168 = arith.constant 7 : index
    %c0_169 = arith.constant 0 : index
    %c0_170 = arith.constant 0 : index
    %182 = vector.load %arg2[%c0_167, %c7_168, %c0_169, %c0_170] : memref<1x16x8x256xf32, #tpu.memory_space<vmem>>, vector<1x1x8x256xf32>
    %183 = vector.shape_cast %182 : vector<1x1x8x256xf32> to vector<8x256xf32>
    %184 = arith.mulf %180, %183 : vector<8x256xf32>
    %185 = arith.addf %176, %184 : vector<8x256xf32>
    %c8_171 = arith.constant 8 : index
    %c0_172 = arith.constant 0 : index
    %c0_173 = arith.constant 0 : index
    %186 = vector.load %arg7[%c8_171, %c0_172, %c0_173] : memref<16x8x256xf32, #tpu.memory_space<vmem>>, vector<1x8x256xf32>
    %187 = vector.shape_cast %186 : vector<1x8x256xf32> to vector<8x256xf32>
    %188 = arith.subf %187, %111 : vector<8x256xf32>
    %189 = math.exp %188 : vector<8x256xf32>
    %190 = arith.addf %181, %189 : vector<8x256xf32>
    %c0_174 = arith.constant 0 : index
    %c8_175 = arith.constant 8 : index
    %c0_176 = arith.constant 0 : index
    %c0_177 = arith.constant 0 : index
    %191 = vector.load %arg2[%c0_174, %c8_175, %c0_176, %c0_177] : memref<1x16x8x256xf32, #tpu.memory_space<vmem>>, vector<1x1x8x256xf32>
    %192 = vector.shape_cast %191 : vector<1x1x8x256xf32> to vector<8x256xf32>
    %193 = arith.mulf %189, %192 : vector<8x256xf32>
    %194 = arith.addf %185, %193 : vector<8x256xf32>
    %c9_178 = arith.constant 9 : index
    %c0_179 = arith.constant 0 : index
    %c0_180 = arith.constant 0 : index
    %195 = vector.load %arg7[%c9_178, %c0_179, %c0_180] : memref<16x8x256xf32, #tpu.memory_space<vmem>>, vector<1x8x256xf32>
    %196 = vector.shape_cast %195 : vector<1x8x256xf32> to vector<8x256xf32>
    %197 = arith.subf %196, %111 : vector<8x256xf32>
    %198 = math.exp %197 : vector<8x256xf32>
    %199 = arith.addf %190, %198 : vector<8x256xf32>
    %c0_181 = arith.constant 0 : index
    %c9_182 = arith.constant 9 : index
    %c0_183 = arith.constant 0 : index
    %c0_184 = arith.constant 0 : index
    %200 = vector.load %arg2[%c0_181, %c9_182, %c0_183, %c0_184] : memref<1x16x8x256xf32, #tpu.memory_space<vmem>>, vector<1x1x8x256xf32>
    %201 = vector.shape_cast %200 : vector<1x1x8x256xf32> to vector<8x256xf32>
    %202 = arith.mulf %198, %201 : vector<8x256xf32>
    %203 = arith.addf %194, %202 : vector<8x256xf32>
    %c10_185 = arith.constant 10 : index
    %c0_186 = arith.constant 0 : index
    %c0_187 = arith.constant 0 : index
    %204 = vector.load %arg7[%c10_185, %c0_186, %c0_187] : memref<16x8x256xf32, #tpu.memory_space<vmem>>, vector<1x8x256xf32>
    %205 = vector.shape_cast %204 : vector<1x8x256xf32> to vector<8x256xf32>
    %206 = arith.subf %205, %111 : vector<8x256xf32>
    %207 = math.exp %206 : vector<8x256xf32>
    %208 = arith.addf %199, %207 : vector<8x256xf32>
    %c0_188 = arith.constant 0 : index
    %c10_189 = arith.constant 10 : index
    %c0_190 = arith.constant 0 : index
    %c0_191 = arith.constant 0 : index
    %209 = vector.load %arg2[%c0_188, %c10_189, %c0_190, %c0_191] : memref<1x16x8x256xf32, #tpu.memory_space<vmem>>, vector<1x1x8x256xf32>
    %210 = vector.shape_cast %209 : vector<1x1x8x256xf32> to vector<8x256xf32>
    %211 = arith.mulf %207, %210 : vector<8x256xf32>
    %212 = arith.addf %203, %211 : vector<8x256xf32>
    %c11_192 = arith.constant 11 : index
    %c0_193 = arith.constant 0 : index
    %c0_194 = arith.constant 0 : index
    %213 = vector.load %arg7[%c11_192, %c0_193, %c0_194] : memref<16x8x256xf32, #tpu.memory_space<vmem>>, vector<1x8x256xf32>
    %214 = vector.shape_cast %213 : vector<1x8x256xf32> to vector<8x256xf32>
    %215 = arith.subf %214, %111 : vector<8x256xf32>
    %216 = math.exp %215 : vector<8x256xf32>
    %217 = arith.addf %208, %216 : vector<8x256xf32>
    %c0_195 = arith.constant 0 : index
    %c11_196 = arith.constant 11 : index
    %c0_197 = arith.constant 0 : index
    %c0_198 = arith.constant 0 : index
    %218 = vector.load %arg2[%c0_195, %c11_196, %c0_197, %c0_198] : memref<1x16x8x256xf32, #tpu.memory_space<vmem>>, vector<1x1x8x256xf32>
    %219 = vector.shape_cast %218 : vector<1x1x8x256xf32> to vector<8x256xf32>
    %220 = arith.mulf %216, %219 : vector<8x256xf32>
    %221 = arith.addf %212, %220 : vector<8x256xf32>
    %c12_199 = arith.constant 12 : index
    %c0_200 = arith.constant 0 : index
    %c0_201 = arith.constant 0 : index
    %222 = vector.load %arg7[%c12_199, %c0_200, %c0_201] : memref<16x8x256xf32, #tpu.memory_space<vmem>>, vector<1x8x256xf32>
    %223 = vector.shape_cast %222 : vector<1x8x256xf32> to vector<8x256xf32>
    %224 = arith.subf %223, %111 : vector<8x256xf32>
    %225 = math.exp %224 : vector<8x256xf32>
    %226 = arith.addf %217, %225 : vector<8x256xf32>
    %c0_202 = arith.constant 0 : index
    %c12_203 = arith.constant 12 : index
    %c0_204 = arith.constant 0 : index
    %c0_205 = arith.constant 0 : index
    %227 = vector.load %arg2[%c0_202, %c12_203, %c0_204, %c0_205] : memref<1x16x8x256xf32, #tpu.memory_space<vmem>>, vector<1x1x8x256xf32>
    %228 = vector.shape_cast %227 : vector<1x1x8x256xf32> to vector<8x256xf32>
    %229 = arith.mulf %225, %228 : vector<8x256xf32>
    %230 = arith.addf %221, %229 : vector<8x256xf32>
    %c13_206 = arith.constant 13 : index
    %c0_207 = arith.constant 0 : index
    %c0_208 = arith.constant 0 : index
    %231 = vector.load %arg7[%c13_206, %c0_207, %c0_208] : memref<16x8x256xf32, #tpu.memory_space<vmem>>, vector<1x8x256xf32>
    %232 = vector.shape_cast %231 : vector<1x8x256xf32> to vector<8x256xf32>
    %233 = arith.subf %232, %111 : vector<8x256xf32>
    %234 = math.exp %233 : vector<8x256xf32>
    %235 = arith.addf %226, %234 : vector<8x256xf32>
    %c0_209 = arith.constant 0 : index
    %c13_210 = arith.constant 13 : index
    %c0_211 = arith.constant 0 : index
    %c0_212 = arith.constant 0 : index
    %236 = vector.load %arg2[%c0_209, %c13_210, %c0_211, %c0_212] : memref<1x16x8x256xf32, #tpu.memory_space<vmem>>, vector<1x1x8x256xf32>
    %237 = vector.shape_cast %236 : vector<1x1x8x256xf32> to vector<8x256xf32>
    %238 = arith.mulf %234, %237 : vector<8x256xf32>
    %239 = arith.addf %230, %238 : vector<8x256xf32>
    %c14_213 = arith.constant 14 : index
    %c0_214 = arith.constant 0 : index
    %c0_215 = arith.constant 0 : index
    %240 = vector.load %arg7[%c14_213, %c0_214, %c0_215] : memref<16x8x256xf32, #tpu.memory_space<vmem>>, vector<1x8x256xf32>
    %241 = vector.shape_cast %240 : vector<1x8x256xf32> to vector<8x256xf32>
    %242 = arith.subf %241, %111 : vector<8x256xf32>
    %243 = math.exp %242 : vector<8x256xf32>
    %244 = arith.addf %235, %243 : vector<8x256xf32>
    %c0_216 = arith.constant 0 : index
    %c14_217 = arith.constant 14 : index
    %c0_218 = arith.constant 0 : index
    %c0_219 = arith.constant 0 : index
    %245 = vector.load %arg2[%c0_216, %c14_217, %c0_218, %c0_219] : memref<1x16x8x256xf32, #tpu.memory_space<vmem>>, vector<1x1x8x256xf32>
    %246 = vector.shape_cast %245 : vector<1x1x8x256xf32> to vector<8x256xf32>
    %247 = arith.mulf %243, %246 : vector<8x256xf32>
    %248 = arith.addf %239, %247 : vector<8x256xf32>
    %c15_220 = arith.constant 15 : index
    %c0_221 = arith.constant 0 : index
    %c0_222 = arith.constant 0 : index
    %249 = vector.load %arg7[%c15_220, %c0_221, %c0_222] : memref<16x8x256xf32, #tpu.memory_space<vmem>>, vector<1x8x256xf32>
    %250 = vector.shape_cast %249 : vector<1x8x256xf32> to vector<8x256xf32>
    %251 = arith.subf %250, %111 : vector<8x256xf32>
    %252 = math.exp %251 : vector<8x256xf32>
    %253 = arith.addf %244, %252 : vector<8x256xf32>
    %c0_223 = arith.constant 0 : index
    %c15_224 = arith.constant 15 : index
    %c0_225 = arith.constant 0 : index
    %c0_226 = arith.constant 0 : index
    %254 = vector.load %arg2[%c0_223, %c15_224, %c0_225, %c0_226] : memref<1x16x8x256xf32, #tpu.memory_space<vmem>>, vector<1x1x8x256xf32>
    %255 = vector.shape_cast %254 : vector<1x1x8x256xf32> to vector<8x256xf32>
    %256 = arith.mulf %252, %255 : vector<8x256xf32>
    %257 = arith.addf %248, %256 : vector<8x256xf32>
    %258 = tpu.reciprocal %253 {approx = true} : vector<8x256xf32> -> vector<8x256xf32>
    %259 = arith.mulf %253, %258 : vector<8x256xf32>
    %cst_227 = arith.constant 2.000000e+00 : f32
    %260 = vector.broadcast %cst_227 : f32 to vector<8x256xf32>
    %261 = arith.subf %260, %259 : vector<8x256xf32>
    %262 = arith.mulf %258, %261 : vector<8x256xf32>
    %263 = arith.mulf %257, %262 : vector<8x256xf32>
    %c0_228 = arith.constant 0 : index
    %c0_229 = arith.constant 0 : index
    %264 = vector.load %arg4[%c0_228, %c0_229] : memref<16x8xf32, #tpu.memory_space<vmem>>, vector<16x8xf32>
    %cst_230 = arith.constant dense<0.000000e+00> : vector<16x256xf32>
    %265 = tpu.matmul %264, %263, %cst_230 {dimension_numbers = #tpu.dot_dimension_numbers<[1], [0], [0], [1], [0, 0, 1, 1], [], []>} : vector<16x8xf32>, vector<8x256xf32>, vector<16x256xf32> -> vector<16x256xf32>
    %c0_231 = arith.constant 0 : index
    %c0_232 = arith.constant 0 : index
    %266 = vector.load %arg5[%c0_231, %c0_232] : memref<16x1xf32, #tpu.memory_space<vmem>>, vector<16x1xf32>
    %267 = vector.broadcast %266 : vector<16x1xf32> to vector<16x256xf32>
    %268 = arith.addf %265, %267 : vector<16x256xf32>
    %cst_233 = arith.constant 0.000000e+00 : f32
    %269 = vector.broadcast %cst_233 : f32 to vector<16x256xf32>
    %270 = arith.maximumf %268, %269 : vector<16x256xf32>
    %c0_234 = arith.constant 0 : index
    %c0_235 = arith.constant 0 : index
    %c0_236 = arith.constant 0 : index
    %271 = vector.load %arg6[%c0_234, %c0_235, %c0_236] : memref<1x16x256xf32, #tpu.memory_space<vmem>>, vector<1x16x256xf32>
    %272 = vector.shape_cast %271 : vector<1x16x256xf32> to vector<16x256xf32>
    %273 = vector.shape_cast %270 : vector<16x256xf32> to vector<1x16x256xf32>
    tpu.vector_store %arg6[%c0_234, %c0_235, %c0_236], %273 {strides = array<i32>} : memref<1x16x256xf32, #tpu.memory_space<vmem>>, vector<1x16x256xf32>,
    return
  }
  func.func @transform_0(%arg0: i32, %arg1: i32) -> (i32, i32, i32, i32) {
    %c0_i32 = arith.constant 0 : i32
    %c0_i32_0 = arith.constant 0 : i32
    %c0_i32_1 = arith.constant 0 : i32
    return %arg0, %c0_i32, %c0_i32_0, %arg1 : i32, i32, i32, i32
  }
  func.func @transform_1(%arg0: i32, %arg1: i32) -> (i32, i32) {
    %c0_i32 = arith.constant 0 : i32
    %c0_i32_0 = arith.constant 0 : i32
    %c0_i32_1 = arith.constant 0 : i32
    return %c0_i32, %c0_i32_0 : i32, i32
  }
  func.func @transform_2(%arg0: i32, %arg1: i32) -> (i32, i32) {
    %c0_i32 = arith.constant 0 : i32
    %c0_i32_0 = arith.constant 0 : i32
    %c0_i32_1 = arith.constant 0 : i32
    return %c0_i32, %c0_i32_0 : i32, i32
  }
  func.func @transform_3(%arg0: i32, %arg1: i32) -> (i32, i32) {
    %c0_i32 = arith.constant 0 : i32
    %c0_i32_0 = arith.constant 0 : i32
    %c0_i32_1 = arith.constant 0 : i32
    return %c0_i32, %c0_i32_0 : i32, i32
  }
  func.func @transform_4(%arg0: i32, %arg1: i32) -> (i32, i32, i32) {
    %c0_i32 = arith.constant 0 : i32
    %c0_i32_0 = arith.constant 0 : i32
    return %arg0, %c0_i32, %arg1 : i32, i32, i32
  }
}

</mosaic_0001>

<llo_original>
// kernel: attentive_pooling.1
$region0: #{attentive_pooling.1}
  #allocation0 [shape = 'u32[]', space=smem, size = 0x4, offset = 0x4, fixed_abs, tag = 'smem constant byte address 0x4 - core index']
  #allocation1 [shape = 'u32[72,128]{1,0:T(1,128)}', space=vmem, size = 0x9000, scoped, tag = 'internal scratch']
  #allocation2 [shape = 'f32[16,8,256]{2,1,0:T(8,128)}', space=vmem, size = 0x20000, scoped, tag = 'scratch operand']
  %s0 = inlined_call_operand.vmem [shape: f32[2,16,8,256], index: 0, kind: input, shape index: {}]
  %s1 = inlined_call_operand.vmem [shape: f32[8,8], index: 1, kind: input, shape index: {}]
  %s2 = inlined_call_operand.vmem [shape: f32[16,8], index: 2, kind: input, shape index: {}]
  %s3 = inlined_call_operand.vmem [shape: f32[16,1], index: 3, kind: input, shape index: {}]
  %s4 = inlined_call_operand.vmem [shape: f32[2,16,256], index: 4, kind: output, shape index: {}]
  %s5 = sld [smem:[#allocation0]]
  $region49: #{attentive_pooling.1} parent=0
    _
  %s7 = ssub.s32 1, %s5
  %s8 = scalar_select 0, %s7, %s5
  loop: start=0, step=1, limit=4
  $region2: #{attentive_pooling.1} parent=0 // loop_pre_header
    _
  $region3: #{attentive_pooling.1} parent=0 // loop_header
    %s10 = sphi 0, %s14
    %p11 = scmp.ge.s32.totalorder %s10, 4
    %s17 = sphi 0, %s29
    %s18 = sphi 0, %s25
    %s19 = sphi 0, %s17
    %s20 = sphi 0, %s18
    %s21 = sphi 0, %s19
    %s22 = sphi 0, %s20
    %s34 = sphi 0, %s36
    %s37 = sphi 0, %s34
    %s38 = sphi 0, %s37
    %s54 = sphi 0, %s38
    %s58 = sphi 0, %s58
    %s60 = sphi 0, %s58
    %s61 = sphi 0, %s60
    %s75 = sphi 0, %s61
    %s79 = sphi 0, %s79
    %s81 = sphi 0, %s79
    %s82 = sphi 0, %s81
    %s96 = sphi 0, %s82
    %s100 = sphi 0, %s100
    %s102 = sphi 0, %s100
    %s103 = sphi 0, %s102
    %s117 = sphi 0, %s103
    %s125 = sphi 0, %s127
    %s128 = sphi 0, %s125
    %s129 = sphi 0, %s128
    %s145 = sphi 0, %s129
  $region4: #{attentive_pooling.1} parent=0 // loop_header_branch
    %13 = sbr.rel (%p11) target = $region8
  $region5: #{attentive_pooling.1} parent=0 // loop_body
    %s15 = ssub.s32 %s10, 1
    %s16 = ssub.s32 %s10, 2
    %s23 = sadd.s32 1, %s18
    %p24 = scmp.ge.s32.totalorder %s23, 1
    %s25 = scalar_select %p24, 0, %s23
    %s26 = sadd.s32 1, %s17
    %s27 = scalar_select %p24, %s26, %s17
    %p28 = scmp.ge.s32.totalorder %s27, 2
    %s29 = scalar_select %p28, 0, %s27
    %s30 = ssub.s32 %s17, %s29
    %s31 = ssub.s32 %s18, %s25
    %s32 = sor.u32 %s30, %s31
    %p33 = scmp.eq.s32.totalorder %s32, 0
    %s35 = sadd.s32 %s34, 1
    %s36 = scalar_select %p33, %s34, %s35
    %p39 = pneg %p33
    %p40 = scmp.eq.s32.totalorder %s10, 1
    %p41 = por %p39, %p40
    %p42 = scmp.ne.s32.totalorder %s34, %s37
    %p43 = scmp.eq.s32.totalorder %s10, 0
    %p44 = por %p42, %p43
    %p45 = scmp.ne.s32.totalorder %s34, %s37
    %p46 = scmp.eq.s32.totalorder %s15, 1
    %p47 = por %p45, %p46
    %p48 = scmp.ne.s32.totalorder %s37, %s38
    %p49 = scmp.eq.s32.totalorder %s15, 0
    %p50 = por %p48, %p49
    %p51 = scmp.ne.s32.totalorder %s37, %s38
    %p52 = scmp.eq.s32.totalorder %s16, 1
    %p53 = por %p51, %p52
    %p55 = scmp.ne.s32.totalorder %s38, %s54
    %p56 = scmp.eq.s32.totalorder %s16, 0
    %p57 = por %p55, %p56
    %s59 = sadd.s32 %s58, 1
    %p62 = scmp.eq.s32.totalorder %s10, 1
    %p63 = scmp.ne.s32.totalorder %s58, %s60
    %p64 = scmp.eq.s32.totalorder %s10, 0
    %p65 = por %p63, %p64
    %p66 = scmp.ne.s32.totalorder %s58, %s60
    %p67 = scmp.eq.s32.totalorder %s15, 1
    %p68 = por %p66, %p67
    %p69 = scmp.ne.s32.totalorder %s60, %s61
    %p70 = scmp.eq.s32.totalorder %s15, 0
    %p71 = por %p69, %p70
    %p72 = scmp.ne.s32.totalorder %s60, %s61
    %p73 = scmp.eq.s32.totalorder %s16, 1
    %p74 = por %p72, %p73
    %p76 = scmp.ne.s32.totalorder %s61, %s75
    %p77 = scmp.eq.s32.totalorder %s16, 0
    %p78 = por %p76, %p77
    %s80 = sadd.s32 %s79, 1
    %p83 = scmp.eq.s32.totalorder %s10, 1
    %p84 = scmp.ne.s32.totalorder %s79, %s81
    %p85 = scmp.eq.s32.totalorder %s10, 0
    %p86 = por %p84, %p85
    %p87 = scmp.ne.s32.totalorder %s79, %s81
    %p88 = scmp.eq.s32.totalorder %s15, 1
    %p89 = por %p87, %p88
    %p90 = scmp.ne.s32.totalorder %s81, %s82
    %p91 = scmp.eq.s32.totalorder %s15, 0
    %p92 = por %p90, %p91
    %p93 = scmp.ne.s32.totalorder %s81, %s82
    %p94 = scmp.eq.s32.totalorder %s16, 1
    %p95 = por %p93, %p94
    %p97 = scmp.ne.s32.totalorder %s82, %s96
    %p98 = scmp.eq.s32.totalorder %s16, 0
    %p99 = por %p97, %p98
    %s101 = sadd.s32 %s100, 1
    %p104 = scmp.eq.s32.totalorder %s10, 1
    %p105 = scmp.ne.s32.totalorder %s100, %s102
    %p106 = scmp.eq.s32.totalorder %s10, 0
    %p107 = por %p105, %p106
    %p108 = scmp.ne.s32.totalorder %s100, %s102
    %p109 = scmp.eq.s32.totalorder %s15, 1
    %p110 = por %p108, %p109
    %p111 = scmp.ne.s32.totalorder %s102, %s103
    %p112 = scmp.eq.s32.totalorder %s15, 0
    %p113 = por %p111, %p112
    %p114 = scmp.ne.s32.totalorder %s102, %s103
    %p115 = scmp.eq.s32.totalorder %s16, 1
    %p116 = por %p114, %p115
    %p118 = scmp.ne.s32.totalorder %s103, %s117
    %p119 = scmp.eq.s32.totalorder %s16, 0
    %p120 = por %p118, %p119
    %s121 = ssub.s32 %s17, %s29
    %s122 = ssub.s32 %s18, %s25
    %s123 = sor.u32 %s121, %s122
    %p124 = scmp.eq.s32.totalorder %s123, 0
    %s126 = sadd.s32 %s125, 1
    %s127 = scalar_select %p124, %s125, %s126
    %p130 = pneg %p124
    %p131 = scmp.eq.s32.totalorder %s10, 1
    %p132 = por %p130, %p131
    %p133 = scmp.ne.s32.totalorder %s125, %s128
    %p134 = scmp.eq.s32.totalorder %s10, 0
    %p135 = por %p133, %p134
    %p136 = scmp.ne.s32.totalorder %s125, %s128
    %p137 = scmp.eq.s32.totalorder %s15, 1
    %p138 = por %p136, %p137
    %p139 = scmp.ne.s32.totalorder %s128, %s129
    %p140 = scmp.eq.s32.totalorder %s15, 0
    %p141 = por %p139, %p140
    %p142 = scmp.ne.s32.totalorder %s128, %s129
    %p143 = scmp.eq.s32.totalorder %s16, 1
    %p144 = por %p142, %p143
    %p146 = scmp.ne.s32.totalorder %s129, %s145
    %p147 = scmp.eq.s32.totalorder %s16, 0
    %p148 = por %p146, %p147
    %p149 = scmp.le.s32.totalorder 1, %s10
    %p150 = scmp.lt.s32.totalorder %s10, 3
    %p151 = pnand %p149, %p150
    %p152 = pneg %p151
    // Predicated region
    $region9: #{attentive_pooling.1} parent=5 // pred_check
      _
    $region10: #{attentive_pooling.1} parent=5 // pred_check_branch
      %154 = sbr.rel (%p151) target = $region12
    $region11: #{attentive_pooling.1} parent=5 // pred_region
      %s155 = ssub.s32 %s10, 1
      // Predicated region
      $region13: #{attentive_pooling.1} parent=11 // pred_check
        %p156 = pneg %p71
      $region14: #{attentive_pooling.1} parent=11 // pred_check_branch
        %158 = sbr.rel (%p156) target = $region16
      $region15: #{attentive_pooling.1} parent=11 // pred_region
        _
      $region16: #{attentive_pooling.1} parent=11 // pred_fallthru
        _
      // Predicated region
      $region17: #{attentive_pooling.1} parent=11 // pred_check
        %p159 = pneg %p92
      $region18: #{attentive_pooling.1} parent=11 // pred_check_branch
        %161 = sbr.rel (%p159) target = $region20
      $region19: #{attentive_pooling.1} parent=11 // pred_region
        _
      $region20: #{attentive_pooling.1} parent=11 // pred_fallthru
        _
      // Predicated region
      $region21: #{attentive_pooling.1} parent=11 // pred_check
        %p162 = pneg %p113
      $region22: #{attentive_pooling.1} parent=11 // pred_check_branch
        %164 = sbr.rel (%p162) target = $region24
      $region23: #{attentive_pooling.1} parent=11 // pred_region
        _
      $region24: #{attentive_pooling.1} parent=11 // pred_fallthru
        _
    $region12: #{attentive_pooling.1} parent=5 // pred_fallthru
      _
    %p165 = scmp.lt.s32.totalorder %s10, 2
    // Predicated region
    $region25: #{attentive_pooling.1} parent=5 // pred_check
      %p166 = pneg %p165
    $region26: #{attentive_pooling.1} parent=5 // pred_check_branch
      %168 = sbr.rel (%p166) target = $region28
    $region27: #{attentive_pooling.1} parent=5 // pred_region
      // Predicated region
      $region29: #{attentive_pooling.1} parent=27 // pred_check
        %p169 = pneg %p44
      $region30: #{attentive_pooling.1} parent=27 // pred_check_branch
        %171 = sbr.rel (%p169) target = $region32
      $region31: #{attentive_pooling.1} parent=27 // pred_region
        %s172 = smul.u32 2, %s18
        %p173 = scmp.lt.s32.totalorder %s17, 1
        %s174 = scalar_select %p173, %s17, 1
        %p175 = scmp.lt.s32.totalorder %s172, 1
        %s176 = scalar_select %p175, %s172, 1
        %s177 = smul.addr %s174, 32
        %s178 = sadd.s32 %s176, %s177
        %s179 = smul.addr %s178, 8
        %s180 = scalar_lea.vmem %s0, %s179
        %s181 = smul.u32 2, %s18
      $region32: #{attentive_pooling.1} parent=27 // pred_fallthru
        _
    $region28: #{attentive_pooling.1} parent=5 // pred_fallthru
      _
    %p182 = scmp.le.s32.totalorder 1, %s10
    %p183 = scmp.lt.s32.totalorder %s10, 3
    %p184 = pnand %p182, %p183
    %p185 = pneg %p184
    // Predicated region
    $region33: #{attentive_pooling.1} parent=5 // pred_check
      _
    $region34: #{attentive_pooling.1} parent=5 // pred_check_branch
      %187 = sbr.rel (%p184) target = $region36
    $region35: #{attentive_pooling.1} parent=5 // pred_region
      %s188 = ssub.s32 %s10, 1
      %s189 = smul.u32 2, %s20
      %p190 = scmp.lt.s32.totalorder %s19, 1
      %s191 = scalar_select %p190, %s19, 1
      %p192 = scmp.lt.s32.totalorder %s189, 1
      %s193 = scalar_select %p192, %s189, 1
      %s194 = smul.addr %s191, 32
      %s195 = sadd.s32 %s193, %s194
      %s196 = smul.addr %s195, 8
      %s197 = scalar_lea.vmem %s0, %s196
      %p198 = pneg %p50
      %p199 = pneg %p47
      %p200 = pneg %p71
      %p201 = pneg %p68
      %p202 = pneg %p92
      %p203 = pneg %p89
      %p204 = pneg %p113
      %p205 = pneg %p110
      %p206 = pneg %p141
      %p207 = pneg %p138
      %s208 = smul.u32 2, %s20
      %p209 = scmp.lt.s32.totalorder %s19, 1
      %s210 = scalar_select %p209, %s19, 1
      %p211 = scmp.lt.s32.totalorder %s208, 1
      %s212 = scalar_select %p211, %s208, 1
      %s213 = smul.addr %s210, 4
      %s214 = sadd.s32 %s212, %s213
      %s215 = smul.addr %s214, 8
      %s216 = scalar_lea.vmem %s4, %s215
      %s217 = smul.u32 2, %s20
      %p218 = scmp.lt.s32.totalorder %s19, 1
      %s219 = scalar_select %p218, %s19, 1
      %p220 = scmp.lt.s32.totalorder %s217, 1
      %s221 = scalar_select %p220, %s217, 1
      %s222 = smul.addr %s219, 32
      %s223 = sadd.s32 %s221, %s222
      %s224 = smul.addr %s223, 8
      %s225 = scalar_lea.vmem %s0, %s224
      %s226 = smul.u32 2, %s20
      %s227 = smul.u32 2, %s20
      %p228 = scmp.lt.s32.totalorder %s19, 1
      %s229 = scalar_select %p228, %s19, 1
      %p230 = scmp.lt.s32.totalorder %s227, 1
      %s231 = scalar_select %p230, %s227, 1
      %s232 = smul.addr %s229, 4
      %s233 = sadd.s32 %s231, %s232
      %s234 = smul.addr %s233, 8
      %s235 = scalar_lea.vmem %s4, %s234
      %s236 = smul.u32 2, %s20
      %v237 = vld [vmem:[%s1] sm:$0xff]
      %v238 = vld [vmem:[%s225] sm:$0xff]
      %v239 = vld [vmem:[%s225 + $0x8] sm:$0xff]
      %vm240 = vcmask 64512
      %v242 = vsel %vm240, %v237, 0
      %244 = vmatpush.msra.mxu0 0.0
      %245 = vmatpush.msra.mxu0 0.0
      %246 = vmatpush.msra.mxu0 0.0
      %247 = vmatpush.msra.mxu0 0.0
      %248 = vmatpush.msra.mxu0 0.0
      %249 = vmatpush.msra.mxu0 0.0
      %250 = vmatpush.msra.mxu0 0.0
      %251 = vmatpush.msra.mxu0 0.0
      %252 = vmatpush.msra.mxu0 0.0
      %253 = vmatpush.msra.mxu0 0.0
      %254 = vmatpush.msra.mxu0 0.0
      %255 = vmatpush.msra.mxu0 0.0
      %256 = vmatpush.msra.mxu0 0.0
      %257 = vmatpush.msra.mxu0 0.0
      %258 = vmatpush.msra.mxu0 0.0
      %259 = vmatpush.msra.mxu0 %v238
      %260 = vmatmul.f32.gmra.mxu0 %v242
      %v261 = vpop.f32.mrf.mxu0
      %v262 = vadd.f32 0.0, %v261
      %263 = vdwg.mxu0
      %264 = vmatpush.msra.mxu0 0.0
      %265 = vmatpush.msra.mxu0 0.0
      %266 = vmatpush.msra.mxu0 0.0
      %267 = vmatpush.msra.mxu0 0.0
      %268 = vmatpush.msra.mxu0 0.0
      %269 = vmatpush.msra.mxu0 0.0
      %270 = vmatpush.msra.mxu0 0.0
      %271 = vmatpush.msra.mxu0 0.0
      %272 = vmatpush.msra.mxu0 0.0
      %273 = vmatpush.msra.mxu0 0.0
      %274 = vmatpush.msra.mxu0 0.0
      %275 = vmatpush.msra.mxu0 0.0
      %276 = vmatpush.msra.mxu0 0.0
      %277 = vmatpush.msra.mxu0 0.0
      %278 = vmatpush.msra.mxu0 0.0
      %279 = vmatpush.msra.mxu0 %v239
      %280 = vmatmul.f32.gmra.mxu0 %v242
      %v281 = vpop.f32.mrf.mxu0
      %v282 = vadd.f32 0.0, %v281
      %283 = vdwg.mxu0
      %284 = vst [vmem:[#allocation2] sm:$0xff] %v262
      %285 = vst [vmem:[#allocation2 + $0x8] sm:$0xff] %v282
      %s286 = scalar_lea.vmem %s225, 16
      %v287 = vld [vmem:[%s286] sm:$0xff]
      %v288 = vld [vmem:[%s286 + $0x8] sm:$0xff]
      %289 = vmatpush.msra.mxu0 0.0
      %290 = vmatpush.msra.mxu0 0.0
      %291 = vmatpush.msra.mxu0 0.0
      %292 = vmatpush.msra.mxu0 0.0
      %293 = vmatpush.msra.mxu0 0.0
      %294 = vmatpush.msra.mxu0 0.0
      %295 = vmatpush.msra.mxu0 0.0
      %296 = vmatpush.msra.mxu0 0.0
      %297 = vmatpush.msra.mxu0 0.0
      %298 = vmatpush.msra.mxu0 0.0
      %299 = vmatpush.msra.mxu0 0.0
      %300 = vmatpush.msra.mxu0 0.0
      %301 = vmatpush.msra.mxu0 0.0
      %302 = vmatpush.msra.mxu0 0.0
      %303 = vmatpush.msra.mxu0 0.0
      %304 = vmatpush.msra.mxu0 %v287
      %305 = vmatmul.f32.gmra.mxu0 %v242
      %v306 = vpop.f32.mrf.mxu0
      %v307 = vadd.f32 0.0, %v306
      %308 = vdwg.mxu0
      %309 = vmatpush.msra.mxu0 0.0
      %310 = vmatpush.msra.mxu0 0.0
      %311 = vmatpush.msra.mxu0 0.0
      %312 = vmatpush.msra.mxu0 0.0
      %313 = vmatpush.msra.mxu0 0.0
      %314 = vmatpush.msra.mxu0 0.0
      %315 = vmatpush.msra.mxu0 0.0
      %316 = vmatpush.msra.mxu0 0.0
      %317 = vmatpush.msra.mxu0 0.0
      %318 = vmatpush.msra.mxu0 0.0
      %319 = vmatpush.msra.mxu0 0.0
      %320 = vmatpush.msra.mxu0 0.0
      %321 = vmatpush.msra.mxu0 0.0
      %322 = vmatpush.msra.mxu0 0.0
      %323 = vmatpush.msra.mxu0 0.0
      %324 = vmatpush.msra.mxu0 %v288
      %325 = vmatmul.f32.gmra.mxu0 %v242
      %v326 = vpop.f32.mrf.mxu0
      %v327 = vadd.f32 0.0, %v326
      %328 = vdwg.mxu0
      %s329 = scalar_lea.vmem [#allocation2], 16
      %330 = vst [vmem:[%s329] sm:$0xff] %v307
      %331 = vst [vmem:[%s329 + $0x8] sm:$0xff] %v327
      %v332 = vmax.f32 %v262, %v307
      %v333 = vmax.f32 %v282, %v327
      %s334 = scalar_lea.vmem %s225, 32
      %v335 = vld [vmem:[%s334] sm:$0xff]
      %v336 = vld [vmem:[%s334 + $0x8] sm:$0xff]
      %337 = vmatpush.msra.mxu0 0.0
      %338 = vmatpush.msra.mxu0 0.0
      %339 = vmatpush.msra.mxu0 0.0
      %340 = vmatpush.msra.mxu0 0.0
      %341 = vmatpush.msra.mxu0 0.0
      %342 = vmatpush.msra.mxu0 0.0
      %343 = vmatpush.msra.mxu0 0.0
      %344 = vmatpush.msra.mxu0 0.0
      %345 = vmatpush.msra.mxu0 0.0
      %346 = vmatpush.msra.mxu0 0.0
      %347 = vmatpush.msra.mxu0 0.0
      %348 = vmatpush.msra.mxu0 0.0
      %349 = vmatpush.msra.mxu0 0.0
      %350 = vmatpush.msra.mxu0 0.0
      %351 = vmatpush.msra.mxu0 0.0
      %352 = vmatpush.msra.mxu0 %v335
      %353 = vmatmul.f32.gmra.mxu0 %v242
      %v354 = vpop.f32.mrf.mxu0
      %v355 = vadd.f32 0.0, %v354
      %356 = vdwg.mxu0
      %357 = vmatpush.msra.mxu0 0.0
      %358 = vmatpush.msra.mxu0 0.0
      %359 = vmatpush.msra.mxu0 0.0
      %360 = vmatpush.msra.mxu0 0.0
      %361 = vmatpush.msra.mxu0 0.0
      %362 = vmatpush.msra.mxu0 0.0
      %363 = vmatpush.msra.mxu0 0.0
      %364 = vmatpush.msra.mxu0 0.0
      %365 = vmatpush.msra.mxu0 0.0
      %366 = vmatpush.msra.mxu0 0.0
      %367 = vmatpush.msra.mxu0 0.0
      %368 = vmatpush.msra.mxu0 0.0
      %369 = vmatpush.msra.mxu0 0.0
      %370 = vmatpush.msra.mxu0 0.0
      %371 = vmatpush.msra.mxu0 0.0
      %372 = vmatpush.msra.mxu0 %v336
      %373 = vmatmul.f32.gmra.mxu0 %v242
      %v374 = vpop.f32.mrf.mxu0
      %v375 = vadd.f32 0.0, %v374
      %376 = vdwg.mxu0
      %s377 = scalar_lea.vmem [#allocation2], 32
      %378 = vst [vmem:[%s377] sm:$0xff] %v355
      %379 = vst [vmem:[%s377 + $0x8] sm:$0xff] %v375
      %v380 = vmax.f32 %v332, %v355
      %v381 = vmax.f32 %v333, %v375
      %s382 = scalar_lea.vmem %s225, 48
      %v383 = vld [vmem:[%s382] sm:$0xff]
      %v384 = vld [vmem:[%s382 + $0x8] sm:$0xff]
      %385 = vmatpush.msra.mxu0 0.0
      %386 = vmatpush.msra.mxu0 0.0
      %387 = vmatpush.msra.mxu0 0.0
      %388 = vmatpush.msra.mxu0 0.0
      %389 = vmatpush.msra.mxu0 0.0
      %390 = vmatpush.msra.mxu0 0.0
      %391 = vmatpush.msra.mxu0 0.0
      %392 = vmatpush.msra.mxu0 0.0
      %393 = vmatpush.msra.mxu0 0.0
      %394 = vmatpush.msra.mxu0 0.0
      %395 = vmatpush.msra.mxu0 0.0
      %396 = vmatpush.msra.mxu0 0.0
      %397 = vmatpush.msra.mxu0 0.0
      %398 = vmatpush.msra.mxu0 0.0
      %399 = vmatpush.msra.mxu0 0.0
      %400 = vmatpush.msra.mxu0 %v383
      %401 = vmatmul.f32.gmra.mxu0 %v242
      %v402 = vpop.f32.mrf.mxu0
      %v403 = vadd.f32 0.0, %v402
      %404 = vdwg.mxu0
      %405 = vmatpush.msra.mxu0 0.0
      %406 = vmatpush.msra.mxu0 0.0
      %407 = vmatpush.msra.mxu0 0.0
      %408 = vmatpush.msra.mxu0 0.0
      %409 = vmatpush.msra.mxu0 0.0
      %410 = vmatpush.msra.mxu0 0.0
      %411 = vmatpush.msra.mxu0 0.0
      %412 = vmatpush.msra.mxu0 0.0
      %413 = vmatpush.msra.mxu0 0.0
      %414 = vmatpush.msra.mxu0 0.0
      %415 = vmatpush.msra.mxu0 0.0
      %416 = vmatpush.msra.mxu0 0.0
      %417 = vmatpush.msra.mxu0 0.0
      %418 = vmatpush.msra.mxu0 0.0
      %419 = vmatpush.msra.mxu0 0.0
      %420 = vmatpush.msra.mxu0 %v384
      %421 = vmatmul.f32.gmra.mxu0 %v242
      %v422 = vpop.f32.mrf.mxu0
      %v423 = vadd.f32 0.0, %v422
      %424 = vdwg.mxu0
      %s425 = scalar_lea.vmem [#allocation2], 48
      %426 = vst [vmem:[%s425] sm:$0xff] %v403
      %427 = vst [vmem:[%s425 + $0x8] sm:$0xff] %v423
      %v428 = vmax.f32 %v380, %v403
      %v429 = vmax.f32 %v381, %v423
      %s430 = scalar_lea.vmem %s225, 64
      %v431 = vld [vmem:[%s430] sm:$0xff]
      %v432 = vld [vmem:[%s430 + $0x8] sm:$0xff]
      %433 = vmatpush.msra.mxu0 0.0
      %434 = vmatpush.msra.mxu0 0.0
      %435 = vmatpush.msra.mxu0 0.0
      %436 = vmatpush.msra.mxu0 0.0
      %437 = vmatpush.msra.mxu0 0.0
      %438 = vmatpush.msra.mxu0 0.0
      %439 = vmatpush.msra.mxu0 0.0
      %440 = vmatpush.msra.mxu0 0.0
      %441 = vmatpush.msra.mxu0 0.0
      %442 = vmatpush.msra.mxu0 0.0
      %443 = vmatpush.msra.mxu0 0.0
      %444 = vmatpush.msra.mxu0 0.0
      %445 = vmatpush.msra.mxu0 0.0
      %446 = vmatpush.msra.mxu0 0.0
      %447 = vmatpush.msra.mxu0 0.0
      %448 = vmatpush.msra.mxu0 %v431
      %449 = vmatmul.f32.gmra.mxu0 %v242
      %v450 = vpop.f32.mrf.mxu0
      %v451 = vadd.f32 0.0, %v450
      %452 = vdwg.mxu0
      %453 = vmatpush.msra.mxu0 0.0
      %454 = vmatpush.msra.mxu0 0.0
      %455 = vmatpush.msra.mxu0 0.0
      %456 = vmatpush.msra.mxu0 0.0
      %457 = vmatpush.msra.mxu0 0.0
      %458 = vmatpush.msra.mxu0 0.0
      %459 = vmatpush.msra.mxu0 0.0
      %460 = vmatpush.msra.mxu0 0.0
      %461 = vmatpush.msra.mxu0 0.0
      %462 = vmatpush.msra.mxu0 0.0
      %463 = vmatpush.msra.mxu0 0.0
      %464 = vmatpush.msra.mxu0 0.0
      %465 = vmatpush.msra.mxu0 0.0
      %466 = vmatpush.msra.mxu0 0.0
      %467 = vmatpush.msra.mxu0 0.0
      %468 = vmatpush.msra.mxu0 %v432
      %469 = vmatmul.f32.gmra.mxu0 %v242
      %v470 = vpop.f32.mrf.mxu0
      %v471 = vadd.f32 0.0, %v470
      %472 = vdwg.mxu0
      %s473 = scalar_lea.vmem [#allocation2], 64
      %474 = vst [vmem:[%s473] sm:$0xff] %v451
      %475 = vst [vmem:[%s473 + $0x8] sm:$0xff] %v471
      %v476 = vmax.f32 %v428, %v451
      %v477 = vmax.f32 %v429, %v471
      %s478 = scalar_lea.vmem %s225, 80
      %v479 = vld [vmem:[%s478] sm:$0xff]
      %v480 = vld [vmem:[%s478 + $0x8] sm:$0xff]
      %481 = vmatpush.msra.mxu0 0.0
      %482 = vmatpush.msra.mxu0 0.0
      %483 = vmatpush.msra.mxu0 0.0
      %484 = vmatpush.msra.mxu0 0.0
      %485 = vmatpush.msra.mxu0 0.0
      %486 = vmatpush.msra.mxu0 0.0
      %487 = vmatpush.msra.mxu0 0.0
      %488 = vmatpush.msra.mxu0 0.0
      %489 = vmatpush.msra.mxu0 0.0
      %490 = vmatpush.msra.mxu0 0.0
      %491 = vmatpush.msra.mxu0 0.0
      %492 = vmatpush.msra.mxu0 0.0
      %493 = vmatpush.msra.mxu0 0.0
      %494 = vmatpush.msra.mxu0 0.0
      %495 = vmatpush.msra.mxu0 0.0
      %496 = vmatpush.msra.mxu0 %v479
      %497 = vmatmul.f32.gmra.mxu0 %v242
      %v498 = vpop.f32.mrf.mxu0
      %v499 = vadd.f32 0.0, %v498
      %500 = vdwg.mxu0
      %501 = vmatpush.msra.mxu0 0.0
      %502 = vmatpush.msra.mxu0 0.0
      %503 = vmatpush.msra.mxu0 0.0
      %504 = vmatpush.msra.mxu0 0.0
      %505 = vmatpush.msra.mxu0 0.0
      %506 = vmatpush.msra.mxu0 0.0
      %507 = vmatpush.msra.mxu0 0.0
      %508 = vmatpush.msra.mxu0 0.0
      %509 = vmatpush.msra.mxu0 0.0
      %510 = vmatpush.msra.mxu0 0.0
      %511 = vmatpush.msra.mxu0 0.0
      %512 = vmatpush.msra.mxu0 0.0
      %513 = vmatpush.msra.mxu0 0.0
      %514 = vmatpush.msra.mxu0 0.0
      %515 = vmatpush.msra.mxu0 0.0
      %516 = vmatpush.msra.mxu0 %v480
      %517 = vmatmul.f32.gmra.mxu0 %v242
      %v518 = vpop.f32.mrf.mxu0
      %v519 = vadd.f32 0.0, %v518
      %520 = vdwg.mxu0
      %s521 = scalar_lea.vmem [#allocation2], 80
      %522 = vst [vmem:[%s521] sm:$0xff] %v499
      %523 = vst [vmem:[%s521 + $0x8] sm:$0xff] %v519
      %v524 = vmax.f32 %v476, %v499
      %v525 = vmax.f32 %v477, %v519
      %s526 = scalar_lea.vmem %s225, 96
      %v527 = vld [vmem:[%s526] sm:$0xff]
      %v528 = vld [vmem:[%s526 + $0x8] sm:$0xff]
      %529 = vmatpush.msra.mxu0 0.0
      %530 = vmatpush.msra.mxu0 0.0
      %531 = vmatpush.msra.mxu0 0.0
      %532 = vmatpush.msra.mxu0 0.0
      %533 = vmatpush.msra.mxu0 0.0
      %534 = vmatpush.msra.mxu0 0.0
      %535 = vmatpush.msra.mxu0 0.0
      %536 = vmatpush.msra.mxu0 0.0
      %537 = vmatpush.msra.mxu0 0.0
      %538 = vmatpush.msra.mxu0 0.0
      %539 = vmatpush.msra.mxu0 0.0
      %540 = vmatpush.msra.mxu0 0.0
      %541 = vmatpush.msra.mxu0 0.0
      %542 = vmatpush.msra.mxu0 0.0
      %543 = vmatpush.msra.mxu0 0.0
      %544 = vmatpush.msra.mxu0 %v527
      %545 = vmatmul.f32.gmra.mxu0 %v242
      %v546 = vpop.f32.mrf.mxu0
      %v547 = vadd.f32 0.0, %v546
      %548 = vdwg.mxu0
      %549 = vmatpush.msra.mxu0 0.0
      %550 = vmatpush.msra.mxu0 0.0
      %551 = vmatpush.msra.mxu0 0.0
      %552 = vmatpush.msra.mxu0 0.0
      %553 = vmatpush.msra.mxu0 0.0
      %554 = vmatpush.msra.mxu0 0.0
      %555 = vmatpush.msra.mxu0 0.0
      %556 = vmatpush.msra.mxu0 0.0
      %557 = vmatpush.msra.mxu0 0.0
      %558 = vmatpush.msra.mxu0 0.0
      %559 = vmatpush.msra.mxu0 0.0
      %560 = vmatpush.msra.mxu0 0.0
      %561 = vmatpush.msra.mxu0 0.0
      %562 = vmatpush.msra.mxu0 0.0
      %563 = vmatpush.msra.mxu0 0.0
      %564 = vmatpush.msra.mxu0 %v528
      %565 = vmatmul.f32.gmra.mxu0 %v242
      %v566 = vpop.f32.mrf.mxu0
      %v567 = vadd.f32 0.0, %v566
      %568 = vdwg.mxu0
      %s569 = scalar_lea.vmem [#allocation2], 96
      %570 = vst [vmem:[%s569] sm:$0xff] %v547
      %571 = vst [vmem:[%s569 + $0x8] sm:$0xff] %v567
      %v572 = vmax.f32 %v524, %v547
      %v573 = vmax.f32 %v525, %v567
      %s574 = scalar_lea.vmem %s225, 112
      %v575 = vld [vmem:[%s574] sm:$0xff]
      %v576 = vld [vmem:[%s574 + $0x8] sm:$0xff]
      %577 = vmatpush.msra.mxu0 0.0
      %578 = vmatpush.msra.mxu0 0.0
      %579 = vmatpush.msra.mxu0 0.0
      %580 = vmatpush.msra.mxu0 0.0
      %581 = vmatpush.msra.mxu0 0.0
      %582 = vmatpush.msra.mxu0 0.0
      %583 = vmatpush.msra.mxu0 0.0
      %584 = vmatpush.msra.mxu0 0.0
      %585 = vmatpush.msra.mxu0 0.0
      %586 = vmatpush.msra.mxu0 0.0
      %587 = vmatpush.msra.mxu0 0.0
      %588 = vmatpush.msra.mxu0 0.0
      %589 = vmatpush.msra.mxu0 0.0
      %590 = vmatpush.msra.mxu0 0.0
      %591 = vmatpush.msra.mxu0 0.0
      %592 = vmatpush.msra.mxu0 %v575
      %593 = vmatmul.f32.gmra.mxu0 %v242
      %v594 = vpop.f32.mrf.mxu0
      %v595 = vadd.f32 0.0, %v594
      %596 = vdwg.mxu0
      %597 = vmatpush.msra.mxu0 0.0
      %598 = vmatpush.msra.mxu0 0.0
      %599 = vmatpush.msra.mxu0 0.0
      %600 = vmatpush.msra.mxu0 0.0
      %601 = vmatpush.msra.mxu0 0.0
      %602 = vmatpush.msra.mxu0 0.0
      %603 = vmatpush.msra.mxu0 0.0
      %604 = vmatpush.msra.mxu0 0.0
      %605 = vmatpush.msra.mxu0 0.0
      %606 = vmatpush.msra.mxu0 0.0
      %607 = vmatpush.msra.mxu0 0.0
      %608 = vmatpush.msra.mxu0 0.0
      %609 = vmatpush.msra.mxu0 0.0
      %610 = vmatpush.msra.mxu0 0.0
      %611 = vmatpush.msra.mxu0 0.0
      %612 = vmatpush.msra.mxu0 %v576
      %613 = vmatmul.f32.gmra.mxu0 %v242
      %v614 = vpop.f32.mrf.mxu0
      %v615 = vadd.f32 0.0, %v614
      %616 = vdwg.mxu0
      %s617 = scalar_lea.vmem [#allocation2], 112
      %618 = vst [vmem:[%s617] sm:$0xff] %v595
      %619 = vst [vmem:[%s617 + $0x8] sm:$0xff] %v615
      %v620 = vmax.f32 %v572, %v595
      %v621 = vmax.f32 %v573, %v615
      %s622 = scalar_lea.vmem %s225, 128
      %v623 = vld [vmem:[%s622] sm:$0xff]
      %v624 = vld [vmem:[%s622 + $0x8] sm:$0xff]
      %625 = vmatpush.msra.mxu0 0.0
      %626 = vmatpush.msra.mxu0 0.0
      %627 = vmatpush.msra.mxu0 0.0
      %628 = vmatpush.msra.mxu0 0.0
      %629 = vmatpush.msra.mxu0 0.0
      %630 = vmatpush.msra.mxu0 0.0
      %631 = vmatpush.msra.mxu0 0.0
      %632 = vmatpush.msra.mxu0 0.0
      %633 = vmatpush.msra.mxu0 0.0
      %634 = vmatpush.msra.mxu0 0.0
      %635 = vmatpush.msra.mxu0 0.0
      %636 = vmatpush.msra.mxu0 0.0
      %637 = vmatpush.msra.mxu0 0.0
      %638 = vmatpush.msra.mxu0 0.0
      %639 = vmatpush.msra.mxu0 0.0
      %640 = vmatpush.msra.mxu0 %v623
      %641 = vmatmul.f32.gmra.mxu0 %v242
      %v642 = vpop.f32.mrf.mxu0
      %v643 = vadd.f32 0.0, %v642
      %644 = vdwg.mxu0
      %645 = vmatpush.msra.mxu0 0.0
      %646 = vmatpush.msra.mxu0 0.0
      %647 = vmatpush.msra.mxu0 0.0
      %648 = vmatpush.msra.mxu0 0.0
      %649 = vmatpush.msra.mxu0 0.0
      %650 = vmatpush.msra.mxu0 0.0
      %651 = vmatpush.msra.mxu0 0.0
      %652 = vmatpush.msra.mxu0 0.0
      %653 = vmatpush.msra.mxu0 0.0
      %654 = vmatpush.msra.mxu0 0.0
      %655 = vmatpush.msra.mxu0 0.0
      %656 = vmatpush.msra.mxu0 0.0
      %657 = vmatpush.msra.mxu0 0.0
      %658 = vmatpush.msra.mxu0 0.0
      %659 = vmatpush.msra.mxu0 0.0
      %660 = vmatpush.msra.mxu0 %v624
      %661 = vmatmul.f32.gmra.mxu0 %v242
      %v662 = vpop.f32.mrf.mxu0
      %v663 = vadd.f32 0.0, %v662
      %664 = vdwg.mxu0
      %s665 = scalar_lea.vmem [#allocation2], 128
      %666 = vst [vmem:[%s665] sm:$0xff] %v643
      %667 = vst [vmem:[%s665 + $0x8] sm:$0xff] %v663
      %v668 = vmax.f32 %v620, %v643
      %v669 = vmax.f32 %v621, %v663
      %s670 = scalar_lea.vmem %s225, 144
      %v671 = vld [vmem:[%s670] sm:$0xff]
      %v672 = vld [vmem:[%s670 + $0x8] sm:$0xff]
      %673 = vmatpush.msra.mxu0 0.0
      %674 = vmatpush.msra.mxu0 0.0
      %675 = vmatpush.msra.mxu0 0.0
      %676 = vmatpush.msra.mxu0 0.0
      %677 = vmatpush.msra.mxu0 0.0
      %678 = vmatpush.msra.mxu0 0.0
      %679 = vmatpush.msra.mxu0 0.0
      %680 = vmatpush.msra.mxu0 0.0
      %681 = vmatpush.msra.mxu0 0.0
      %682 = vmatpush.msra.mxu0 0.0
      %683 = vmatpush.msra.mxu0 0.0
      %684 = vmatpush.msra.mxu0 0.0
      %685 = vmatpush.msra.mxu0 0.0
      %686 = vmatpush.msra.mxu0 0.0
      %687 = vmatpush.msra.mxu0 0.0
      %688 = vmatpush.msra.mxu0 %v671
      %689 = vmatmul.f32.gmra.mxu0 %v242
      %v690 = vpop.f32.mrf.mxu0
      %v691 = vadd.f32 0.0, %v690
      %692 = vdwg.mxu0
      %693 = vmatpush.msra.mxu0 0.0
      %694 = vmatpush.msra.mxu0 0.0
      %695 = vmatpush.msra.mxu0 0.0
      %696 = vmatpush.msra.mxu0 0.0
      %697 = vmatpush.msra.mxu0 0.0
      %698 = vmatpush.msra.mxu0 0.0
      %699 = vmatpush.msra.mxu0 0.0
      %700 = vmatpush.msra.mxu0 0.0
      %701 = vmatpush.msra.mxu0 0.0
      %702 = vmatpush.msra.mxu0 0.0
      %703 = vmatpush.msra.mxu0 0.0
      %704 = vmatpush.msra.mxu0 0.0
      %705 = vmatpush.msra.mxu0 0.0
      %706 = vmatpush.msra.mxu0 0.0
      %707 = vmatpush.msra.mxu0 0.0
      %708 = vmatpush.msra.mxu0 %v672
      %709 = vmatmul.f32.gmra.mxu0 %v242
      %v710 = vpop.f32.mrf.mxu0
      %v711 = vadd.f32 0.0, %v710
      %712 = vdwg.mxu0
      %s713 = scalar_lea.vmem [#allocation2], 144
      %714 = vst [vmem:[%s713] sm:$0xff] %v691
      %715 = vst [vmem:[%s713 + $0x8] sm:$0xff] %v711
      %v716 = vmax.f32 %v668, %v691
      %v717 = vmax.f32 %v669, %v711
      %s718 = scalar_lea.vmem %s225, 160
      %v719 = vld [vmem:[%s718] sm:$0xff]
      %v720 = vld [vmem:[%s718 + $0x8] sm:$0xff]
      %721 = vmatpush.msra.mxu0 0.0
      %722 = vmatpush.msra.mxu0 0.0
      %723 = vmatpush.msra.mxu0 0.0
      %724 = vmatpush.msra.mxu0 0.0
      %725 = vmatpush.msra.mxu0 0.0
      %726 = vmatpush.msra.mxu0 0.0
      %727 = vmatpush.msra.mxu0 0.0
      %728 = vmatpush.msra.mxu0 0.0
      %729 = vmatpush.msra.mxu0 0.0
      %730 = vmatpush.msra.mxu0 0.0
      %731 = vmatpush.msra.mxu0 0.0
      %732 = vmatpush.msra.mxu0 0.0
      %733 = vmatpush.msra.mxu0 0.0
      %734 = vmatpush.msra.mxu0 0.0
      %735 = vmatpush.msra.mxu0 0.0
      %736 = vmatpush.msra.mxu0 %v719
      %737 = vmatmul.f32.gmra.mxu0 %v242
      %v738 = vpop.f32.mrf.mxu0
      %v739 = vadd.f32 0.0, %v738
      %740 = vdwg.mxu0
      %741 = vmatpush.msra.mxu0 0.0
      %742 = vmatpush.msra.mxu0 0.0
      %743 = vmatpush.msra.mxu0 0.0
      %744 = vmatpush.msra.mxu0 0.0
      %745 = vmatpush.msra.mxu0 0.0
      %746 = vmatpush.msra.mxu0 0.0
      %747 = vmatpush.msra.mxu0 0.0
      %748 = vmatpush.msra.mxu0 0.0
      %749 = vmatpush.msra.mxu0 0.0
      %750 = vmatpush.msra.mxu0 0.0
      %751 = vmatpush.msra.mxu0 0.0
      %752 = vmatpush.msra.mxu0 0.0
      %753 = vmatpush.msra.mxu0 0.0
      %754 = vmatpush.msra.mxu0 0.0
      %755 = vmatpush.msra.mxu0 0.0
      %756 = vmatpush.msra.mxu0 %v720
      %757 = vmatmul.f32.gmra.mxu0 %v242
      %v758 = vpop.f32.mrf.mxu0
      %v759 = vadd.f32 0.0, %v758
      %760 = vdwg.mxu0
      %s761 = scalar_lea.vmem [#allocation2], 160
      %762 = vst [vmem:[%s761] sm:$0xff] %v739
      %763 = vst [vmem:[%s761 + $0x8] sm:$0xff] %v759
      %v764 = vmax.f32 %v716, %v739
      %v765 = vmax.f32 %v717, %v759
      %s766 = scalar_lea.vmem %s225, 176
      %v767 = vld [vmem:[%s766] sm:$0xff]
      %v768 = vld [vmem:[%s766 + $0x8] sm:$0xff]
      %769 = vmatpush.msra.mxu0 0.0
      %770 = vmatpush.msra.mxu0 0.0
      %771 = vmatpush.msra.mxu0 0.0
      %772 = vmatpush.msra.mxu0 0.0
      %773 = vmatpush.msra.mxu0 0.0
      %774 = vmatpush.msra.mxu0 0.0
      %775 = vmatpush.msra.mxu0 0.0
      %776 = vmatpush.msra.mxu0 0.0
      %777 = vmatpush.msra.mxu0 0.0
      %778 = vmatpush.msra.mxu0 0.0
      %779 = vmatpush.msra.mxu0 0.0
      %780 = vmatpush.msra.mxu0 0.0
      %781 = vmatpush.msra.mxu0 0.0
      %782 = vmatpush.msra.mxu0 0.0
      %783 = vmatpush.msra.mxu0 0.0
      %784 = vmatpush.msra.mxu0 %v767
      %785 = vmatmul.f32.gmra.mxu0 %v242
      %v786 = vpop.f32.mrf.mxu0
      %v787 = vadd.f32 0.0, %v786
      %788 = vdwg.mxu0
      %789 = vmatpush.msra.mxu0 0.0
      %790 = vmatpush.msra.mxu0 0.0
      %791 = vmatpush.msra.mxu0 0.0
      %792 = vmatpush.msra.mxu0 0.0
      %793 = vmatpush.msra.mxu0 0.0
      %794 = vmatpush.msra.mxu0 0.0
      %795 = vmatpush.msra.mxu0 0.0
      %796 = vmatpush.msra.mxu0 0.0
      %797 = vmatpush.msra.mxu0 0.0
      %798 = vmatpush.msra.mxu0 0.0
      %799 = vmatpush.msra.mxu0 0.0
      %800 = vmatpush.msra.mxu0 0.0
      %801 = vmatpush.msra.mxu0 0.0
      %802 = vmatpush.msra.mxu0 0.0
      %803 = vmatpush.msra.mxu0 0.0
      %804 = vmatpush.msra.mxu0 %v768
      %805 = vmatmul.f32.gmra.mxu0 %v242
      %v806 = vpop.f32.mrf.mxu0
      %v807 = vadd.f32 0.0, %v806
      %808 = vdwg.mxu0
      %s809 = scalar_lea.vmem [#allocation2], 176
      %810 = vst [vmem:[%s809] sm:$0xff] %v787
      %811 = vst [vmem:[%s809 + $0x8] sm:$0xff] %v807
      %v812 = vmax.f32 %v764, %v787
      %v813 = vmax.f32 %v765, %v807
      %s814 = scalar_lea.vmem %s225, 192
      %v815 = vld [vmem:[%s814] sm:$0xff]
      %v816 = vld [vmem:[%s814 + $0x8] sm:$0xff]
      %817 = vmatpush.msra.mxu0 0.0
      %818 = vmatpush.msra.mxu0 0.0
      %819 = vmatpush.msra.mxu0 0.0
      %820 = vmatpush.msra.mxu0 0.0
      %821 = vmatpush.msra.mxu0 0.0
      %822 = vmatpush.msra.mxu0 0.0
      %823 = vmatpush.msra.mxu0 0.0
      %824 = vmatpush.msra.mxu0 0.0
      %825 = vmatpush.msra.mxu0 0.0
      %826 = vmatpush.msra.mxu0 0.0
      %827 = vmatpush.msra.mxu0 0.0
      %828 = vmatpush.msra.mxu0 0.0
      %829 = vmatpush.msra.mxu0 0.0
      %830 = vmatpush.msra.mxu0 0.0
      %831 = vmatpush.msra.mxu0 0.0
      %832 = vmatpush.msra.mxu0 %v815
      %833 = vmatmul.f32.gmra.mxu0 %v242
      %v834 = vpop.f32.mrf.mxu0
      %v835 = vadd.f32 0.0, %v834
      %836 = vdwg.mxu0
      %837 = vmatpush.msra.mxu0 0.0
      %838 = vmatpush.msra.mxu0 0.0
      %839 = vmatpush.msra.mxu0 0.0
      %840 = vmatpush.msra.mxu0 0.0
      %841 = vmatpush.msra.mxu0 0.0
      %842 = vmatpush.msra.mxu0 0.0
      %843 = vmatpush.msra.mxu0 0.0
      %844 = vmatpush.msra.mxu0 0.0
      %845 = vmatpush.msra.mxu0 0.0
      %846 = vmatpush.msra.mxu0 0.0
      %847 = vmatpush.msra.mxu0 0.0
      %848 = vmatpush.msra.mxu0 0.0
      %849 = vmatpush.msra.mxu0 0.0
      %850 = vmatpush.msra.mxu0 0.0
      %851 = vmatpush.msra.mxu0 0.0
      %852 = vmatpush.msra.mxu0 %v816
      %853 = vmatmul.f32.gmra.mxu0 %v242
      %v854 = vpop.f32.mrf.mxu0
      %v855 = vadd.f32 0.0, %v854
      %856 = vdwg.mxu0
      %s857 = scalar_lea.vmem [#allocation2], 192
      %858 = vst [vmem:[%s857] sm:$0xff] %v835
      %859 = vst [vmem:[%s857 + $0x8] sm:$0xff] %v855
      %v860 = vmax.f32 %v812, %v835
      %v861 = vmax.f32 %v813, %v855
      %s862 = scalar_lea.vmem %s225, 208
      %v863 = vld [vmem:[%s862] sm:$0xff]
      %v864 = vld [vmem:[%s862 + $0x8] sm:$0xff]
      %865 = vmatpush.msra.mxu0 0.0
      %866 = vmatpush.msra.mxu0 0.0
      %867 = vmatpush.msra.mxu0 0.0
      %868 = vmatpush.msra.mxu0 0.0
      %869 = vmatpush.msra.mxu0 0.0
      %870 = vmatpush.msra.mxu0 0.0
      %871 = vmatpush.msra.mxu0 0.0
      %872 = vmatpush.msra.mxu0 0.0
      %873 = vmatpush.msra.mxu0 0.0
      %874 = vmatpush.msra.mxu0 0.0
      %875 = vmatpush.msra.mxu0 0.0
      %876 = vmatpush.msra.mxu0 0.0
      %877 = vmatpush.msra.mxu0 0.0
      %878 = vmatpush.msra.mxu0 0.0
      %879 = vmatpush.msra.mxu0 0.0
      %880 = vmatpush.msra.mxu0 %v863
      %881 = vmatmul.f32.gmra.mxu0 %v242
      %v882 = vpop.f32.mrf.mxu0
      %v883 = vadd.f32 0.0, %v882
      %884 = vdwg.mxu0
      %885 = vmatpush.msra.mxu0 0.0
      %886 = vmatpush.msra.mxu0 0.0
      %887 = vmatpush.msra.mxu0 0.0
      %888 = vmatpush.msra.mxu0 0.0
      %889 = vmatpush.msra.mxu0 0.0
      %890 = vmatpush.msra.mxu0 0.0
      %891 = vmatpush.msra.mxu0 0.0
      %892 = vmatpush.msra.mxu0 0.0
      %893 = vmatpush.msra.mxu0 0.0
      %894 = vmatpush.msra.mxu0 0.0
      %895 = vmatpush.msra.mxu0 0.0
      %896 = vmatpush.msra.mxu0 0.0
      %897 = vmatpush.msra.mxu0 0.0
      %898 = vmatpush.msra.mxu0 0.0
      %899 = vmatpush.msra.mxu0 0.0
      %900 = vmatpush.msra.mxu0 %v864
      %901 = vmatmul.f32.gmra.mxu0 %v242
      %v902 = vpop.f32.mrf.mxu0
      %v903 = vadd.f32 0.0, %v902
      %904 = vdwg.mxu0
      %s905 = scalar_lea.vmem [#allocation2], 208
      %906 = vst [vmem:[%s905] sm:$0xff] %v883
      %907 = vst [vmem:[%s905 + $0x8] sm:$0xff] %v903
      %v908 = vmax.f32 %v860, %v883
      %v909 = vmax.f32 %v861, %v903
      %s910 = scalar_lea.vmem %s225, 224
      %v911 = vld [vmem:[%s910] sm:$0xff]
      %v912 = vld [vmem:[%s910 + $0x8] sm:$0xff]
      %913 = vmatpush.msra.mxu0 0.0
      %914 = vmatpush.msra.mxu0 0.0
      %915 = vmatpush.msra.mxu0 0.0
      %916 = vmatpush.msra.mxu0 0.0
      %917 = vmatpush.msra.mxu0 0.0
      %918 = vmatpush.msra.mxu0 0.0
      %919 = vmatpush.msra.mxu0 0.0
      %920 = vmatpush.msra.mxu0 0.0
      %921 = vmatpush.msra.mxu0 0.0
      %922 = vmatpush.msra.mxu0 0.0
      %923 = vmatpush.msra.mxu0 0.0
      %924 = vmatpush.msra.mxu0 0.0
      %925 = vmatpush.msra.mxu0 0.0
      %926 = vmatpush.msra.mxu0 0.0
      %927 = vmatpush.msra.mxu0 0.0
      %928 = vmatpush.msra.mxu0 %v911
      %929 = vmatmul.f32.gmra.mxu0 %v242
      %v930 = vpop.f32.mrf.mxu0
      %v931 = vadd.f32 0.0, %v930
      %932 = vdwg.mxu0
      %933 = vmatpush.msra.mxu0 0.0
      %934 = vmatpush.msra.mxu0 0.0
      %935 = vmatpush.msra.mxu0 0.0
      %936 = vmatpush.msra.mxu0 0.0
      %937 = vmatpush.msra.mxu0 0.0
      %938 = vmatpush.msra.mxu0 0.0
      %939 = vmatpush.msra.mxu0 0.0
      %940 = vmatpush.msra.mxu0 0.0
      %941 = vmatpush.msra.mxu0 0.0
      %942 = vmatpush.msra.mxu0 0.0
      %943 = vmatpush.msra.mxu0 0.0
      %944 = vmatpush.msra.mxu0 0.0
      %945 = vmatpush.msra.mxu0 0.0
      %946 = vmatpush.msra.mxu0 0.0
      %947 = vmatpush.msra.mxu0 0.0
      %948 = vmatpush.msra.mxu0 %v912
      %949 = vmatmul.f32.gmra.mxu0 %v242
      %v950 = vpop.f32.mrf.mxu0
      %v951 = vadd.f32 0.0, %v950
      %952 = vdwg.mxu0
      %s953 = scalar_lea.vmem [#allocation2], 224
      %954 = vst [vmem:[%s953] sm:$0xff] %v931
      %955 = vst [vmem:[%s953 + $0x8] sm:$0xff] %v951
      %v956 = vmax.f32 %v908, %v931
      %v957 = vmax.f32 %v909, %v951
      %s958 = scalar_lea.vmem %s225, 240
      %v959 = vld [vmem:[%s958] sm:$0xff]
      %v960 = vld [vmem:[%s958 + $0x8] sm:$0xff]
      %961 = vmatpush.msra.mxu0 0.0
      %962 = vmatpush.msra.mxu0 0.0
      %963 = vmatpush.msra.mxu0 0.0
      %964 = vmatpush.msra.mxu0 0.0
      %965 = vmatpush.msra.mxu0 0.0
      %966 = vmatpush.msra.mxu0 0.0
      %967 = vmatpush.msra.mxu0 0.0
      %968 = vmatpush.msra.mxu0 0.0
      %969 = vmatpush.msra.mxu0 0.0
      %970 = vmatpush.msra.mxu0 0.0
      %971 = vmatpush.msra.mxu0 0.0
      %972 = vmatpush.msra.mxu0 0.0
      %973 = vmatpush.msra.mxu0 0.0
      %974 = vmatpush.msra.mxu0 0.0
      %975 = vmatpush.msra.mxu0 0.0
      %976 = vmatpush.msra.mxu0 %v959
      %977 = vmatmul.f32.gmra.mxu0 %v242
      %v978 = vpop.f32.mrf.mxu0
      %v979 = vadd.f32 0.0, %v978
      %980 = vdwg.mxu0
      %981 = vmatpush.msra.mxu0 0.0
      %982 = vmatpush.msra.mxu0 0.0
      %983 = vmatpush.msra.mxu0 0.0
      %984 = vmatpush.msra.mxu0 0.0
      %985 = vmatpush.msra.mxu0 0.0
      %986 = vmatpush.msra.mxu0 0.0
      %987 = vmatpush.msra.mxu0 0.0
      %988 = vmatpush.msra.mxu0 0.0
      %989 = vmatpush.msra.mxu0 0.0
      %990 = vmatpush.msra.mxu0 0.0
      %991 = vmatpush.msra.mxu0 0.0
      %992 = vmatpush.msra.mxu0 0.0
      %993 = vmatpush.msra.mxu0 0.0
      %994 = vmatpush.msra.mxu0 0.0
      %995 = vmatpush.msra.mxu0 0.0
      %996 = vmatpush.msra.mxu0 %v960
      %997 = vmatmul.f32.gmra.mxu0 %v242
      %v998 = vpop.f32.mrf.mxu0
      %v999 = vadd.f32 0.0, %v998
      %1000 = vdwg.mxu0
      %s1001 = scalar_lea.vmem [#allocation2], 240
      %1002 = vst [vmem:[%s1001] sm:$0xff] %v979
      %1003 = vst [vmem:[%s1001 + $0x8] sm:$0xff] %v999
      %v1004 = vmax.f32 %v956, %v979
      %v1005 = vmax.f32 %v957, %v999
      %v1006 = vld [vmem:[#allocation2] sm:$0xff]
      %v1007 = vld [vmem:[#allocation2 + $0x8] sm:$0xff]
      %v1008 = vsub.f32 %v1006, %v1004
      %v1009 = vsub.f32 %v1007, %v1005
      %v1010 = vmul.f32 %v1008, 1.442695
      %v1011 = vpow.pop %v1010
      %v1012 = vmul.f32 %v1009, 1.442695
      %v1013 = vpow.pop %v1012
      %v1014 = vadd.f32 %v1011, 0.0
      %v1015 = vadd.f32 %v1013, 0.0
      %v1016 = vld [vmem:[%s225] sm:$0xff]
      %v1017 = vld [vmem:[%s225 + $0x8] sm:$0xff]
      %v1018 = vmul.f32 %v1011, %v1016
      %v1019 = vmul.f32 %v1013, %v1017
      %v1020 = vadd.f32 %v1018, 0.0
      %v1021 = vadd.f32 %v1019, 0.0
      %v1022 = vld [vmem:[%s329] sm:$0xff]
      %v1023 = vld [vmem:[%s329 + $0x8] sm:$0xff]
      %v1024 = vsub.f32 %v1022, %v1004
      %v1025 = vsub.f32 %v1023, %v1005
      %v1026 = vmul.f32 %v1024, 1.442695
      %v1027 = vpow.pop %v1026
      %v1028 = vmul.f32 %v1025, 1.442695
      %v1029 = vpow.pop %v1028
      %v1030 = vadd.f32 %v1014, %v1027
      %v1031 = vadd.f32 %v1015, %v1029
      %v1032 = vld [vmem:[%s286] sm:$0xff]
      %v1033 = vld [vmem:[%s286 + $0x8] sm:$0xff]
      %v1034 = vmul.f32 %v1027, %v1032
      %v1035 = vmul.f32 %v1029, %v1033
      %v1036 = vadd.f32 %v1020, %v1034
      %v1037 = vadd.f32 %v1021, %v1035
      %v1038 = vld [vmem:[%s377] sm:$0xff]
      %v1039 = vld [vmem:[%s377 + $0x8] sm:$0xff]
      %v1040 = vsub.f32 %v1038, %v1004
      %v1041 = vsub.f32 %v1039, %v1005
      %v1042 = vmul.f32 %v1040, 1.442695
      %v1043 = vpow.pop %v1042
      %v1044 = vmul.f32 %v1041, 1.442695
      %v1045 = vpow.pop %v1044
      %v1046 = vadd.f32 %v1030, %v1043
      %v1047 = vadd.f32 %v1031, %v1045
      %v1048 = vld [vmem:[%s334] sm:$0xff]
      %v1049 = vld [vmem:[%s334 + $0x8] sm:$0xff]
      %v1050 = vmul.f32 %v1043, %v1048
      %v1051 = vmul.f32 %v1045, %v1049
      %v1052 = vadd.f32 %v1036, %v1050
      %v1053 = vadd.f32 %v1037, %v1051
      %v1054 = vld [vmem:[%s425] sm:$0xff]
      %v1055 = vld [vmem:[%s425 + $0x8] sm:$0xff]
      %v1056 = vsub.f32 %v1054, %v1004
      %v1057 = vsub.f32 %v1055, %v1005
      %v1058 = vmul.f32 %v1056, 1.442695
      %v1059 = vpow.pop %v1058
      %v1060 = vmul.f32 %v1057, 1.442695
      %v1061 = vpow.pop %v1060
      %v1062 = vadd.f32 %v1046, %v1059
      %v1063 = vadd.f32 %v1047, %v1061
      %v1064 = vld [vmem:[%s382] sm:$0xff]
      %v1065 = vld [vmem:[%s382 + $0x8] sm:$0xff]
      %v1066 = vmul.f32 %v1059, %v1064
      %v1067 = vmul.f32 %v1061, %v1065
      %v1068 = vadd.f32 %v1052, %v1066
      %v1069 = vadd.f32 %v1053, %v1067
      %v1070 = vld [vmem:[%s473] sm:$0xff]
      %v1071 = vld [vmem:[%s473 + $0x8] sm:$0xff]
      %v1072 = vsub.f32 %v1070, %v1004
      %v1073 = vsub.f32 %v1071, %v1005
      %v1074 = vmul.f32 %v1072, 1.442695
      %v1075 = vpow.pop %v1074
      %v1076 = vmul.f32 %v1073, 1.442695
      %v1077 = vpow.pop %v1076
      %v1078 = vadd.f32 %v1062, %v1075
      %v1079 = vadd.f32 %v1063, %v1077
      %v1080 = vld [vmem:[%s430] sm:$0xff]
      %v1081 = vld [vmem:[%s430 + $0x8] sm:$0xff]
      %v1082 = vmul.f32 %v1075, %v1080
      %v1083 = vmul.f32 %v1077, %v1081
      %v1084 = vadd.f32 %v1068, %v1082
      %v1085 = vadd.f32 %v1069, %v1083
      %v1086 = vld [vmem:[%s521] sm:$0xff]
      %v1087 = vld [vmem:[%s521 + $0x8] sm:$0xff]
      %v1088 = vsub.f32 %v1086, %v1004
      %v1089 = vsub.f32 %v1087, %v1005
      %v1090 = vmul.f32 %v1088, 1.442695
      %v1091 = vpow.pop %v1090
      %v1092 = vmul.f32 %v1089, 1.442695
      %v1093 = vpow.pop %v1092
      %v1094 = vadd.f32 %v1078, %v1091
      %v1095 = vadd.f32 %v1079, %v1093
      %v1096 = vld [vmem:[%s478] sm:$0xff]
      %v1097 = vld [vmem:[%s478 + $0x8] sm:$0xff]
      %v1098 = vmul.f32 %v1091, %v1096
      %v1099 = vmul.f32 %v1093, %v1097
      %v1100 = vadd.f32 %v1084, %v1098
      %v1101 = vadd.f32 %v1085, %v1099
      %v1102 = vld [vmem:[%s569] sm:$0xff]
      %v1103 = vld [vmem:[%s569 + $0x8] sm:$0xff]
      %v1104 = vsub.f32 %v1102, %v1004
      %v1105 = vsub.f32 %v1103, %v1005
      %v1106 = vmul.f32 %v1104, 1.442695
      %v1107 = vpow.pop %v1106
      %v1108 = vmul.f32 %v1105, 1.442695
      %v1109 = vpow.pop %v1108
      %v1110 = vadd.f32 %v1094, %v1107
      %v1111 = vadd.f32 %v1095, %v1109
      %v1112 = vld [vmem:[%s526] sm:$0xff]
      %v1113 = vld [vmem:[%s526 + $0x8] sm:$0xff]
      %v1114 = vmul.f32 %v1107, %v1112
      %v1115 = vmul.f32 %v1109, %v1113
      %v1116 = vadd.f32 %v1100, %v1114
      %v1117 = vadd.f32 %v1101, %v1115
      %v1118 = vld [vmem:[%s617] sm:$0xff]
      %v1119 = vld [vmem:[%s617 + $0x8] sm:$0xff]
      %v1120 = vsub.f32 %v1118, %v1004
      %v1121 = vsub.f32 %v1119, %v1005
      %v1122 = vmul.f32 %v1120, 1.442695
      %v1123 = vpow.pop %v1122
      %v1124 = vmul.f32 %v1121, 1.442695
      %v1125 = vpow.pop %v1124
      %v1126 = vadd.f32 %v1110, %v1123
      %v1127 = vadd.f32 %v1111, %v1125
      %v1128 = vld [vmem:[%s574] sm:$0xff]
      %v1129 = vld [vmem:[%s574 + $0x8] sm:$0xff]
      %v1130 = vmul.f32 %v1123, %v1128
      %v1131 = vmul.f32 %v1125, %v1129
      %v1132 = vadd.f32 %v1116, %v1130
      %v1133 = vadd.f32 %v1117, %v1131
      %v1134 = vld [vmem:[%s665] sm:$0xff]
      %v1135 = vld [vmem:[%s665 + $0x8] sm:$0xff]
      %v1136 = vsub.f32 %v1134, %v1004
      %v1137 = vsub.f32 %v1135, %v1005
      %v1138 = vmul.f32 %v1136, 1.442695
      %v1139 = vpow.pop %v1138
      %v1140 = vmul.f32 %v1137, 1.442695
      %v1141 = vpow.pop %v1140
      %v1142 = vadd.f32 %v1126, %v1139
      %v1143 = vadd.f32 %v1127, %v1141
      %v1144 = vld [vmem:[%s622] sm:$0xff]
      %v1145 = vld [vmem:[%s622 + $0x8] sm:$0xff]
      %v1146 = vmul.f32 %v1139, %v1144
      %v1147 = vmul.f32 %v1141, %v1145
      %v1148 = vadd.f32 %v1132, %v1146
      %v1149 = vadd.f32 %v1133, %v1147
      %v1150 = vld [vmem:[%s713] sm:$0xff]
      %v1151 = vld [vmem:[%s713 + $0x8] sm:$0xff]
      %v1152 = vsub.f32 %v1150, %v1004
      %v1153 = vsub.f32 %v1151, %v1005
      %v1154 = vmul.f32 %v1152, 1.442695
      %v1155 = vpow.pop %v1154
      %v1156 = vmul.f32 %v1153, 1.442695
      %v1157 = vpow.pop %v1156
      %v1158 = vadd.f32 %v1142, %v1155
      %v1159 = vadd.f32 %v1143, %v1157
      %v1160 = vld [vmem:[%s670] sm:$0xff]
      %v1161 = vld [vmem:[%s670 + $0x8] sm:$0xff]
      %v1162 = vmul.f32 %v1155, %v1160
      %v1163 = vmul.f32 %v1157, %v1161
      %v1164 = vadd.f32 %v1148, %v1162
      %v1165 = vadd.f32 %v1149, %v1163
      %v1166 = vld [vmem:[%s761] sm:$0xff]
      %v1167 = vld [vmem:[%s761 + $0x8] sm:$0xff]
      %v1168 = vsub.f32 %v1166, %v1004
      %v1169 = vsub.f32 %v1167, %v1005
      %v1170 = vmul.f32 %v1168, 1.442695
      %v1171 = vpow.pop %v1170
      %v1172 = vmul.f32 %v1169, 1.442695
      %v1173 = vpow.pop %v1172
      %v1174 = vadd.f32 %v1158, %v1171
      %v1175 = vadd.f32 %v1159, %v1173
      %v1176 = vld [vmem:[%s718] sm:$0xff]
      %v1177 = vld [vmem:[%s718 + $0x8] sm:$0xff]
      %v1178 = vmul.f32 %v1171, %v1176
      %v1179 = vmul.f32 %v1173, %v1177
      %v1180 = vadd.f32 %v1164, %v1178
      %v1181 = vadd.f32 %v1165, %v1179
      %v1182 = vld [vmem:[%s809] sm:$0xff]
      %v1183 = vld [vmem:[%s809 + $0x8] sm:$0xff]
      %v1184 = vsub.f32 %v1182, %v1004
      %v1185 = vsub.f32 %v1183, %v1005
      %v1186 = vmul.f32 %v1184, 1.442695
      %v1187 = vpow.pop %v1186
      %v1188 = vmul.f32 %v1185, 1.442695
      %v1189 = vpow.pop %v1188
      %v1190 = vadd.f32 %v1174, %v1187
      %v1191 = vadd.f32 %v1175, %v1189
      %v1192 = vld [vmem:[%s766] sm:$0xff]
      %v1193 = vld [vmem:[%s766 + $0x8] sm:$0xff]
      %v1194 = vmul.f32 %v1187, %v1192
      %v1195 = vmul.f32 %v1189, %v1193
      %v1196 = vadd.f32 %v1180, %v1194
      %v1197 = vadd.f32 %v1181, %v1195
      %v1198 = vld [vmem:[%s857] sm:$0xff]
      %v1199 = vld [vmem:[%s857 + $0x8] sm:$0xff]
      %v1200 = vsub.f32 %v1198, %v1004
      %v1201 = vsub.f32 %v1199, %v1005
      %v1202 = vmul.f32 %v1200, 1.442695
      %v1203 = vpow.pop %v1202
      %v1204 = vmul.f32 %v1201, 1.442695
      %v1205 = vpow.pop %v1204
      %v1206 = vadd.f32 %v1190, %v1203
      %v1207 = vadd.f32 %v1191, %v1205
      %v1208 = vld [vmem:[%s814] sm:$0xff]
      %v1209 = vld [vmem:[%s814 + $0x8] sm:$0xff]
      %v1210 = vmul.f32 %v1203, %v1208
      %v1211 = vmul.f32 %v1205, %v1209
      %v1212 = vadd.f32 %v1196, %v1210
      %v1213 = vadd.f32 %v1197, %v1211
      %v1214 = vld [vmem:[%s905] sm:$0xff]
      %v1215 = vld [vmem:[%s905 + $0x8] sm:$0xff]
      %v1216 = vsub.f32 %v1214, %v1004
      %v1217 = vsub.f32 %v1215, %v1005
      %v1218 = vmul.f32 %v1216, 1.442695
      %v1219 = vpow.pop %v1218
      %v1220 = vmul.f32 %v1217, 1.442695
      %v1221 = vpow.pop %v1220
      %v1222 = vadd.f32 %v1206, %v1219
      %v1223 = vadd.f32 %v1207, %v1221
      %v1224 = vld [vmem:[%s862] sm:$0xff]
      %v1225 = vld [vmem:[%s862 + $0x8] sm:$0xff]
      %v1226 = vmul.f32 %v1219, %v1224
      %v1227 = vmul.f32 %v1221, %v1225
      %v1228 = vadd.f32 %v1212, %v1226
      %v1229 = vadd.f32 %v1213, %v1227
      %v1230 = vld [vmem:[%s953] sm:$0xff]
      %v1231 = vld [vmem:[%s953 + $0x8] sm:$0xff]
      %v1232 = vsub.f32 %v1230, %v1004
      %v1233 = vsub.f32 %v1231, %v1005
      %v1234 = vmul.f32 %v1232, 1.442695
      %v1235 = vpow.pop %v1234
      %v1236 = vmul.f32 %v1233, 1.442695
      %v1237 = vpow.pop %v1236
      %v1238 = vadd.f32 %v1222, %v1235
      %v1239 = vadd.f32 %v1223, %v1237
      %v1240 = vld [vmem:[%s910] sm:$0xff]
      %v1241 = vld [vmem:[%s910 + $0x8] sm:$0xff]
      %v1242 = vmul.f32 %v1235, %v1240
      %v1243 = vmul.f32 %v1237, %v1241
      %v1244 = vadd.f32 %v1228, %v1242
      %v1245 = vadd.f32 %v1229, %v1243
      %v1246 = vld [vmem:[%s1001] sm:$0xff]
      %v1247 = vld [vmem:[%s1001 + $0x8] sm:$0xff]
      %v1248 = vsub.f32 %v1246, %v1004
      %v1249 = vsub.f32 %v1247, %v1005
      %v1250 = vmul.f32 %v1248, 1.442695
      %v1251 = vpow.pop %v1250
      %v1252 = vmul.f32 %v1249, 1.442695
      %v1253 = vpow.pop %v1252
      %v1254 = vadd.f32 %v1238, %v1251
      %v1255 = vadd.f32 %v1239, %v1253
      %v1256 = vld [vmem:[%s958] sm:$0xff]
      %v1257 = vld [vmem:[%s958 + $0x8] sm:$0xff]
      %v1258 = vmul.f32 %v1251, %v1256
      %v1259 = vmul.f32 %v1253, %v1257
      %v1260 = vadd.f32 %v1244, %v1258
      %v1261 = vadd.f32 %v1245, %v1259
      %v1262 = vrcp.pop %v1254
      %v1263 = vrcp.pop %v1255
      %v1264 = vmul.f32 %v1254, %v1262
      %v1265 = vmul.f32 %v1255, %v1263
      %v1266 = vsub.f32 2.0, %v1264
      %v1267 = vsub.f32 2.0, %v1265
      %v1268 = vmul.f32 %v1262, %v1266
      %v1269 = vmul.f32 %v1263, %v1267
      %v1270 = vmul.f32 %v1260, %v1268
      %v1271 = vmul.f32 %v1261, %v1269
      %v1272 = vld [vmem:[%s2] sm:$0xff]
      %v1273 = vld [vmem:[%s2 + $0x8] sm:$0xff]
      %v1274 = vld [vmem:[%s3] sm:$0xff]
      %v1275 = vld [vmem:[%s3 + $0x8] sm:$0xff]
      %1277 = vset.pattern.permute.xlu0 0
      %1278 = vperm.xlu0 %1277, %v1274
      %v1279 = vpop.permute.xlu0 %1278
      %1282 = vset.pattern.permute.xlu0 0
      %1283 = vperm.xlu0 %1282, %v1275
      %v1284 = vpop.permute.xlu0 %1283
      %v1287 = vsel %vm240, %v1272, 0
      %v1290 = vsel %vm240, %v1273, 0
      %1292 = vmatpush.msra.mxu0 0.0
      %1293 = vmatpush.msra.mxu0 0.0
      %1294 = vmatpush.msra.mxu0 0.0
      %1295 = vmatpush.msra.mxu0 0.0
      %1296 = vmatpush.msra.mxu0 0.0
      %1297 = vmatpush.msra.mxu0 0.0
      %1298 = vmatpush.msra.mxu0 0.0
      %1299 = vmatpush.msra.mxu0 0.0
      %1300 = vmatpush.msra.mxu0 0.0
      %1301 = vmatpush.msra.mxu0 0.0
      %1302 = vmatpush.msra.mxu0 0.0
      %1303 = vmatpush.msra.mxu0 0.0
      %1304 = vmatpush.msra.mxu0 0.0
      %1305 = vmatpush.msra.mxu0 0.0
      %1306 = vmatpush.msra.mxu0 0.0
      %1307 = vmatpush.msra.mxu0 %v1270
      %1308 = vmatmul.f32.gmra.mxu0 %v1287
      %v1309 = vpop.f32.mrf.mxu0
      %v1310 = vadd.f32 %v1279, %v1309
      %1311 = vmatmul.f32.gmra.mxu0 %v1290
      %v1312 = vpop.f32.mrf.mxu0
      %v1313 = vadd.f32 %v1284, %v1312
      %1314 = vdwg.mxu0
      %1315 = vmatpush.msra.mxu0 0.0
      %1316 = vmatpush.msra.mxu0 0.0
      %1317 = vmatpush.msra.mxu0 0.0
      %1318 = vmatpush.msra.mxu0 0.0
      %1319 = vmatpush.msra.mxu0 0.0
      %1320 = vmatpush.msra.mxu0 0.0
      %1321 = vmatpush.msra.mxu0 0.0
      %1322 = vmatpush.msra.mxu0 0.0
      %1323 = vmatpush.msra.mxu0 0.0
      %1324 = vmatpush.msra.mxu0 0.0
      %1325 = vmatpush.msra.mxu0 0.0
      %1326 = vmatpush.msra.mxu0 0.0
      %1327 = vmatpush.msra.mxu0 0.0
      %1328 = vmatpush.msra.mxu0 0.0
      %1329 = vmatpush.msra.mxu0 0.0
      %1330 = vmatpush.msra.mxu0 %v1271
      %1331 = vmatmul.f32.gmra.mxu0 %v1287
      %v1332 = vpop.f32.mrf.mxu0
      %v1333 = vadd.f32 %v1279, %v1332
      %1334 = vmatmul.f32.gmra.mxu0 %v1290
      %v1335 = vpop.f32.mrf.mxu0
      %v1336 = vadd.f32 %v1284, %v1335
      %1337 = vdwg.mxu0
      %v1338 = vmax.f32 %v1310, 0.0
      %v1339 = vmax.f32 %v1333, 0.0
      %v1340 = vmax.f32 %v1313, 0.0
      %v1341 = vmax.f32 %v1336, 0.0
      %1342 = vst [vmem:[%s235] sm:$0xff] %v1338
      %1343 = vst [vmem:[%s235 + $0x8] sm:$0xff] %v1339
      %1344 = vst [vmem:[%s235 + $0x10] sm:$0xff] %v1340
      %1345 = vst [vmem:[%s235 + $0x18] sm:$0xff] %v1341
      %s1346 = smul.u32 2, %s20
      %p1347 = scmp.lt.s32.totalorder %s19, 1
      %s1348 = scalar_select %p1347, %s19, 1
      %p1349 = scmp.lt.s32.totalorder %s1346, 1
      %s1350 = scalar_select %p1349, %s1346, 1
      %s1351 = smul.addr %s1348, 4
      %s1352 = sadd.s32 %s1350, %s1351
      %s1353 = smul.addr %s1352, 8
      %s1354 = scalar_lea.vmem %s4, %s1353
      // Predicated region
      $region37: #{attentive_pooling.1} parent=35 // pred_check
        %p1355 = pneg %p138
      $region38: #{attentive_pooling.1} parent=35 // pred_check_branch
        %1357 = sbr.rel (%p1355) target = $region40
      $region39: #{attentive_pooling.1} parent=35 // pred_region
        %s1358 = smul.u32 2, %s20
      $region40: #{attentive_pooling.1} parent=35 // pred_fallthru
        _
    $region36: #{attentive_pooling.1} parent=5 // pred_fallthru
      _
    %p1359 = scmp.le.s32.totalorder 2, %s10
    // Predicated region
    $region41: #{attentive_pooling.1} parent=5 // pred_check
      %p1360 = pneg %p1359
    $region42: #{attentive_pooling.1} parent=5 // pred_check_branch
      %1362 = sbr.rel (%p1360) target = $region44
    $region43: #{attentive_pooling.1} parent=5 // pred_region
      %s1363 = ssub.s32 %s10, 2
      // Predicated region
      $region45: #{attentive_pooling.1} parent=43 // pred_check
        %p1364 = pneg %p144
      $region46: #{attentive_pooling.1} parent=43 // pred_check_branch
        %1366 = sbr.rel (%p1364) target = $region48
      $region47: #{attentive_pooling.1} parent=43 // pred_region
        %s1367 = smul.u32 2, %s22
        %p1368 = scmp.lt.s32.totalorder %s21, 1
        %s1369 = scalar_select %p1368, %s21, 1
        %p1370 = scmp.lt.s32.totalorder %s1367, 1
        %s1371 = scalar_select %p1370, %s1367, 1
        %s1372 = smul.addr %s1369, 4
        %s1373 = sadd.s32 %s1371, %s1372
        %s1374 = smul.addr %s1373, 8
        %s1375 = scalar_lea.vmem %s4, %s1374
      $region48: #{attentive_pooling.1} parent=43 // pred_fallthru
        _
    $region44: #{attentive_pooling.1} parent=5 // pred_fallthru
      _
  $region6: #{attentive_pooling.1} parent=0 // loop_footer
    %s14 = sadd.s32 1, %s10
  $region7: #{attentive_pooling.1} parent=0 // loop_footer_branch
    %9 = sbr.rel target = $region3
  $region8: #{attentive_pooling.1} parent=0 // loop_exit
    _

</llo_original>
